<compile_context>
chip_gen: v6e
topology: v6e:2x2x1
jax: 0.10.0
libtpu: 0.0.40
codegen_flags: <defaults>
</compile_context>

<pallas_src>
import functools

import numpy as np
import jax
import jax.numpy as jnp
from jax import lax
from jax.experimental import pallas as pl
from jax.experimental.pallas import tpu as pltpu

_EPS = 1e-5
_VMEM_LIMIT = 32 * 1024 * 1024


# ----------------------------- Pallas kernels -------------------------------

def _conv_tap_kernel(x_ref, w_ref, b_ref, m_ref, o_ref, *,
                     offsets, lacc, count, mode, eps):
    """Direct (im2col-free) stride-1 conv + bias + epilogue for one sample.

    x_ref: (1, Lin, Cin)   NHWC-flattened padded input (spatial on sublanes)
    w_ref: (T, Cout, Cin)  per-tap weight matrices
    b_ref: (Cout, 1)       bias
    m_ref: (1, lacc)       validity mask (1.0 for real output columns)
    o_ref: (1, Cout, lacc) lane-dense output (spatial on lanes)

    Column j of the accumulator corresponds to the flat padded position
    j = h*Wp + w; columns with w >= Wo are "row-wrap" garbage and are excluded
    from the InstanceNorm statistics via the mask (and discarded by the caller).
    """
    nt = (((1,), (1,)), ((), ()))          # contract Cin of both operands: A @ B^T
    acc = None
    for t, off in enumerate(offsets):
        xs = x_ref[0, off:off + lacc, :]                       # (lacc, Cin)
        p = lax.dot_general(w_ref[t], xs, nt,
                            preferred_element_type=jnp.float32)  # (Cout, lacc)
        acc = p if acc is None else acc + p
    acc = acc + b_ref[...]
    if mode == "tanh":
        y = jnp.tanh(acc)
    else:
        m = m_ref[...]                                         # (1, lacc)
        inv = 1.0 / count
        mean = jnp.sum(acc * m, axis=-1, keepdims=True) * inv
        xc = acc - mean
        var = jnp.sum((xc * xc) * m, axis=-1, keepdims=True) * inv
        y = xc * lax.rsqrt(var + eps)
        if mode == "in_relu":
            y = jnp.maximum(y, 0.0)
    o_ref[0] = y


def _conv_acc_kernel(x_ref, w_ref, b_ref, o_ref, acc_ref, *, relu, eps):
    """im2col conv with a K-split reduction grid axis + fused bias+IN+ReLU.

    grid = (N, KH);  x_ref: (1, 1, Kc, M);  w_ref: (1, Cout, Kc);
    b_ref: (Cout, 1);  o_ref: (1, Cout, M);  acc_ref: VMEM (Cout, M) f32.
    """
    k = pl.program_id(1)

    @pl.when(k == 0)
    def _():
        acc_ref[...] = jnp.zeros_like(acc_ref)

    acc_ref[...] += jnp.dot(w_ref[0], x_ref[0, 0],
                            preferred_element_type=jnp.float32)

    @pl.when(k == pl.num_programs(1) - 1)
    def _():
        acc = acc_ref[...] + b_ref[...]
        mean = jnp.mean(acc, axis=-1, keepdims=True)
        xc = acc - mean
        var = jnp.mean(xc * xc, axis=-1, keepdims=True)
        y = xc * lax.rsqrt(var + eps)
        if relu:
            y = jnp.maximum(y, 0.0)
        o_ref[0] = y


# ------------------------------ Layer wrappers -------------------------------

def conv_tap_layer(x_nchw, w, b, pad, pad_mode, mode, eps=_EPS):
    """Fused KxK stride-1 conv + bias + {InstanceNorm[+ReLU] | tanh}.

    x_nchw: (N, Cin, H, W);  w: (KH, KW, Cin, Cout);  returns (N, Cout, Ho, Wo).
    """
    KH, KW, Cin, Cout = w.shape
    if pad:
        x_nchw = jnp.pad(x_nchw, ((0, 0), (0, 0), (pad, pad), (pad, pad)),
                         mode=pad_mode)
    N, _, Hp, Wp = x_nchw.shape
    Ho, Wo = Hp - KH + 1, Wp - KW + 1
    lacc = (Ho - 1) * Wp + Wo
    offsets = tuple(kh * Wp + kw for kh in range(KH) for kw in range(KW))

    # NHWC-flat input: flat spatial index (h*Wp + w) on sublanes, channels on lanes.
    x_flat = jnp.transpose(x_nchw, (0, 2, 3, 1)).reshape(N, Hp * Wp, Cin)
    w_taps = jnp.transpose(w, (0, 1, 3, 2)).reshape(KH * KW, Cout, Cin)
    # Static validity mask for the IN statistics (built at trace time).
    mask = jnp.asarray(((np.arange(lacc) % Wp) < Wo).astype(np.float32)
                       ).reshape(1, lacc)

    out = pl.pallas_call(
        functools.partial(_conv_tap_kernel, offsets=offsets, lacc=lacc,
                          count=float(Ho * Wo), mode=mode, eps=eps),
        out_shape=jax.ShapeDtypeStruct((N, Cout, lacc), jnp.float32),
        grid=(N,),
        in_specs=[pl.BlockSpec((1, Hp * Wp, Cin), lambda i: (i, 0, 0)),
                  pl.BlockSpec((KH * KW, Cout, Cin), lambda i: (0, 0, 0)),
                  pl.BlockSpec((Cout, 1), lambda i: (0, 0)),
                  pl.BlockSpec((1, lacc), lambda i: (0, 0))],
        out_specs=pl.BlockSpec((1, Cout, lacc), lambda i: (i, 0, 0)),
        compiler_params=pltpu.CompilerParams(
            dimension_semantics=("parallel",),
            vmem_limit_bytes=_VMEM_LIMIT),
    )(x_flat, w_taps, b.reshape(Cout, 1), mask)

    # Undo the row-overhang layout: column h*Wp + w  ->  pixel (h, w).
    out = jnp.pad(out, ((0, 0), (0, 0), (0, Ho * Wp - lacc)))
    return out.reshape(N, Cout, Ho, Wp)[:, :, :, :Wo]


def conv_im2col_layer(x_nchw, w, b, stride, pad, pad_mode="constant", eps=_EPS):
    """im2col conv + bias + IN + ReLU (only used for the Cin=3 stem and the
    two stride-2 downsamplers).  K is split over KH grid steps to keep VMEM
    small on every TPU generation."""
    KH, KW, Cin, Cout = w.shape
    if pad:
        x_nchw = jnp.pad(x_nchw, ((0, 0), (0, 0), (pad, pad), (pad, pad)),
                         mode=pad_mode)
    N, _, Hp, Wp = x_nchw.shape
    Ho = (Hp - KH) // stride + 1
    Wo = (Wp - KW) // stride + 1
    M = Ho * Wo
    Kc = KW * Cin

    cols = []
    for kh in range(KH):
        for kw in range(KW):
            cols.append(x_nchw[:, :, kh:kh + stride * (Ho - 1) + 1:stride,
                                     kw:kw + stride * (Wo - 1) + 1:stride])
    # (N, KH, KW*Cin, Ho*Wo): the row-tap axis KH is a reduction grid axis.
    patches = jnp.concatenate(cols, axis=1).reshape(N, KH, Kc, M)
    w3 = jnp.transpose(w, (0, 3, 1, 2)).reshape(KH, Cout, Kc)

    out = pl.pallas_call(
        functools.partial(_conv_acc_kernel, relu=True, eps=eps),
        out_shape=jax.ShapeDtypeStruct((N, Cout, M), jnp.float32),
        grid=(N, KH),
        in_specs=[pl.BlockSpec((1, 1, Kc, M), lambda i, k: (i, k, 0, 0)),
                  pl.BlockSpec((1, Cout, Kc), lambda i, k: (k, 0, 0)),
                  pl.BlockSpec((Cout, 1), lambda i, k: (0, 0))],
        out_specs=pl.BlockSpec((1, Cout, M), lambda i, k: (i, 0, 0)),
        scratch_shapes=[pltpu.VMEM((Cout, M), jnp.float32)],
        compiler_params=pltpu.CompilerParams(
            dimension_semantics=("parallel", "arbitrary"),
            vmem_limit_bytes=_VMEM_LIMIT),
    )(patches, w3, b.reshape(Cout, 1))
    return out.reshape(N, Cout, Ho, Wo)


# -------------------------- Pure-jnp reference (self test) -------------------

def _reference_conv_layer(x_nchw, w, b, stride, pad, pad_mode, mode, eps=_EPS):
    KH, KW, Cin, Cout = w.shape
    if pad:
        x_nchw = jnp.pad(x_nchw, ((0, 0), (0, 0), (pad, pad), (pad, pad)),
                         mode=pad_mode)
    N, _, Hp, Wp = x_nchw.shape
    Ho = (Hp - KH) // stride + 1
    Wo = (Wp - KW) // stride + 1
    cols = [x_nchw[:, :, kh:kh + stride * (Ho - 1) + 1:stride,
                        kw:kw + stride * (Wo - 1) + 1:stride]
            for kh in range(KH) for kw in range(KW)]
    p = jnp.stack(cols, axis=1)                       # (N, T, Cin, Ho, Wo)
    wr = w.reshape(KH * KW, Cin, Cout)
    y = jnp.einsum("ntihw,tio->nohw", p, wr,
                   precision=lax.Precision.HIGHEST) + b[None, :, None, None]
    if mode == "tanh":
        return jnp.tanh(y)
    mean = jnp.mean(y, axis=(2, 3), keepdims=True)
    var = jnp.mean((y - mean) ** 2, axis=(2, 3), keepdims=True)
    y = (y - mean) * lax.rsqrt(var + eps)
    if mode == "in_relu":
        y = jnp.maximum(y, 0.0)
    return y


# ------------------------------ Parameters -----------------------------------

def init_conv(key, kh, kw, cin, cout):
    k1, k2 = jax.random.split(key)
    fan_in = kh * kw * cin
    bound = 1.0 / np.sqrt(fan_in)
    w = jax.random.uniform(k1, (kh, kw, cin, cout), jnp.float32, -bound, bound)
    b = jax.random.uniform(k2, (cout,), jnp.float32, -bound, bound)
    return w, b


def init_params(key, input_nc, output_nc, ngf):
    keys = jax.random.split(key, 64)
    ki = iter(keys)
    c = ngf * 4
    p = {}
    p["m0"] = init_conv(next(ki), 7, 7, input_nc, ngf)
    p["m1"] = init_conv(next(ki), 3, 3, ngf, ngf * 2)
    p["m2"] = init_conv(next(ki), 3, 3, ngf * 2, ngf * 4)
    p["m3"] = [init_conv(next(ki), 3, 3, c, c) + init_conv(next(ki), 3, 3, c, c)
               for _ in range(9)]
    p["m4"] = [init_conv(next(ki), 3, 3, c, c) for _ in range(8)]
    p["m5"] = [init_conv(next(ki), 3, 3, c, c) for _ in range(8)]
    p["out64"] = init_conv(next(ki), 7, 7, c, output_nc)
    p["out48"] = init_conv(next(ki), 7, 7, c, output_nc)
    p["out32"] = init_conv(next(ki), 7, 7, c, output_nc)
    return p


# ------------------------------ Forward pass ----------------------------------

@jax.jit
def gridnet_forward(params, x):
    """x: (N, input_nc, H, W) float32 (NCHW, like the PyTorch reference)."""
    # model_0: ReflectionPad(3) -> Conv7 -> IN -> ReLU  (im2col path, Cin tiny)
    feature_256 = conv_im2col_layer(x, *params["m0"], stride=1, pad=3,
                                    pad_mode="reflect")
    # model_1 / model_2: Conv3 s2 p1 -> IN -> ReLU  (im2col path, stride 2)
    feature_128 = conv_im2col_layer(feature_256, *params["m1"], stride=2, pad=1)
    feature_64 = conv_im2col_layer(feature_128, *params["m2"], stride=2, pad=1)

    # model_3: 9 ResnetBlocks (direct-tap kernels, IN fused; residual add in XLA)
    h = feature_64
    for (w1, b1, w2, b2) in params["m3"]:
        t = conv_tap_layer(h, w1, b1, pad=1, pad_mode="reflect", mode="in_relu")
        t = conv_tap_layer(t, w2, b2, pad=1, pad_mode="reflect", mode="in")
        h = h + t                     # use_dropout=False -> no dropout layer
    output_for_64 = h

    # model_4: 8 x [Conv3 pad0 -> IN -> ReLU]
    h = output_for_64
    for (w, b) in params["m4"]:
        h = conv_tap_layer(h, w, b, pad=0, pad_mode=None, mode="in_relu")
    output_for_48 = h

    # model_5: 8 x [Conv3 pad0 -> IN -> ReLU]
    h = output_for_48
    for (w, b) in params["m5"]:
        h = conv_tap_layer(h, w, b, pad=0, pad_mode=None, mode="in_relu")
    output_for_32 = h

    # output heads: ReflectionPad(3) -> Conv7 -> Tanh (bias + tanh fused in kernel)
    def head(feat, wb):
        return conv_tap_layer(feat, wb[0], wb[1], pad=3, pad_mode="reflect",
                              mode="tanh")

    output_64 = head(output_for_64, params["out64"])
    output_48 = head(output_for_48, params["out48"])
    output_32 = head(output_for_32, params["out32"])

    return (feature_256, feature_128, feature_64,
            output_32, output_48, output_64)


# ---------------------------------- Main ---------------------------------------

if __name__ == "__main__":
    # NOTE: spatial size 144 is the smallest that survives the 16 pad-0 3x3 convs
    # of model_4 + model_5 and still allows ReflectionPad2d(3) on the 4x4 result.
    input_nc, output_nc, ngf = 3, 3, 8
    N, H, W = 2, 144, 144

    key = jax.random.PRNGKey(0)
    pkey, xkey = jax.random.split(key)
    params = init_params(pkey, input_nc, output_nc, ngf)
    x = jax.random.normal(xkey, (N, input_nc, H, W), jnp.float32)   # NCHW

    # Small correctness self-check of both conv kernel paths vs a jnp reference.
    tw, tb = init_conv(jax.random.PRNGKey(1), 3, 3, 8, 8)
    tx = jax.random.normal(jax.random.PRNGKey(2), (2, 8, 12, 12), jnp.float32)
    got = conv_tap_layer(tx, tw, tb, pad=1, pad_mode="reflect", mode="in_relu")
    want = _reference_conv_layer(tx, tw, tb, 1, 1, "reflect", "in_relu")
    np.testing.assert_allclose(np.asarray(got), np.asarray(want),
                               rtol=2e-3, atol=2e-3)
    got2 = conv_im2col_layer(tx, tw, tb, stride=2, pad=1)
    want2 = _reference_conv_layer(tx, tw, tb, 2, 1, "constant", "in_relu")
    np.testing.assert_allclose(np.asarray(got2), np.asarray(want2),
                               rtol=2e-3, atol=2e-3)

    outs = gridnet_forward(params, x)
    outs = jax.block_until_ready(outs)
    f256, f128, f64, o32, o48, o64 = outs

    assert f256.shape == (N, ngf, H, W)
    assert f128.shape == (N, ngf * 2, H // 2, W // 2)
    assert f64.shape == (N, ngf * 4, H // 4, W // 4)
    assert o64.shape == (N, output_nc, H // 4, W // 4)
    assert o48.shape == (N, output_nc, H // 4 - 16, W // 4 - 16)
    assert o32.shape == (N, output_nc, H // 4 - 32, W // 4 - 32)
    for o in (f256, f128, f64, o32, o48, o64):
        assert bool(jnp.all(jnp.isfinite(o)))
    print("KERNEL_OK")
</pallas_src>

<mosaic_0001>
module attributes {stable_mosaic.version = 11 : i64} {
  func.func @_conv_tap_kernel(%arg0: i32, %arg1: memref<1x196x8xf32, #tpu.memory_space<vmem>>, %arg2: memref<9x8x8xf32, #tpu.memory_space<vmem>>, %arg3: memref<8x1xf32, #tpu.memory_space<vmem>>, %arg4: memref<1x166xf32, #tpu.memory_space<vmem>>, %arg5: memref<1x8x166xf32, #tpu.memory_space<vmem>>) attributes {dimension_semantics = [#tpu.dimension_semantics<parallel>], iteration_bounds = array<i64: 2>, scalar_prefetch = 0 : i64, scratch_operands = 0 : i64, tpu.core_type = #tpu.core_type<tc>, window_params = [{transform_indices = @transform_0, window_bounds = array<i64: 1, 196, 8>}, {pipeline_mode = #tpu.pipeline_mode<synchronous>, transform_indices = @transform_1, window_bounds = array<i64: 9, 8, 8>}, {pipeline_mode = #tpu.pipeline_mode<synchronous>, transform_indices = @transform_2, window_bounds = array<i64: 8, 1>}, {pipeline_mode = #tpu.pipeline_mode<synchronous>, transform_indices = @transform_3, window_bounds = array<i64: 1, 166>}, {transform_indices = @transform_4, window_bounds = array<i64: 1, 8, 166>}]} {
    %c0 = arith.constant 0 : index
    %c0_0 = arith.constant 0 : index
    %c0_1 = arith.constant 0 : index
    %0 = vector.load %arg1[%c0, %c0_0, %c0_1] : memref<1x196x8xf32, #tpu.memory_space<vmem>>, vector<1x166x8xf32>
    %1 = vector.shape_cast %0 : vector<1x166x8xf32> to vector<166x8xf32>
    %c0_2 = arith.constant 0 : index
    %c0_3 = arith.constant 0 : index
    %c0_4 = arith.constant 0 : index
    %2 = vector.load %arg2[%c0_2, %c0_3, %c0_4] : memref<9x8x8xf32, #tpu.memory_space<vmem>>, vector<1x8x8xf32>
    %3 = vector.shape_cast %2 : vector<1x8x8xf32> to vector<8x8xf32>
    %cst = arith.constant dense<0.000000e+00> : vector<8x166xf32>
    %4 = tpu.matmul %3, %1, %cst {dimension_numbers = #tpu.dot_dimension_numbers<[1], [1], [0], [0], [0, 0, 1, 0], [], []>} : vector<8x8xf32>, vector<166x8xf32>, vector<8x166xf32> -> vector<8x166xf32>
    %c0_5 = arith.constant 0 : index
    %c1 = arith.constant 1 : index
    %c0_6 = arith.constant 0 : index
    %5 = vector.load %arg1[%c0_5, %c1, %c0_6] : memref<1x196x8xf32, #tpu.memory_space<vmem>>, vector<1x166x8xf32>
    %6 = vector.shape_cast %5 : vector<1x166x8xf32> to vector<166x8xf32>
    %c1_7 = arith.constant 1 : index
    %c0_8 = arith.constant 0 : index
    %c0_9 = arith.constant 0 : index
    %7 = vector.load %arg2[%c1_7, %c0_8, %c0_9] : memref<9x8x8xf32, #tpu.memory_space<vmem>>, vector<1x8x8xf32>
    %8 = vector.shape_cast %7 : vector<1x8x8xf32> to vector<8x8xf32>
    %cst_10 = arith.constant dense<0.000000e+00> : vector<8x166xf32>
    %9 = tpu.matmul %8, %6, %cst_10 {dimension_numbers = #tpu.dot_dimension_numbers<[1], [1], [0], [0], [0, 0, 1, 0], [], []>} : vector<8x8xf32>, vector<166x8xf32>, vector<8x166xf32> -> vector<8x166xf32>
    %10 = arith.addf %4, %9 : vector<8x166xf32>
    %c0_11 = arith.constant 0 : index
    %c2 = arith.constant 2 : index
    %c0_12 = arith.constant 0 : index
    %11 = vector.load %arg1[%c0_11, %c2, %c0_12] : memref<1x196x8xf32, #tpu.memory_space<vmem>>, vector<1x166x8xf32>
    %12 = vector.shape_cast %11 : vector<1x166x8xf32> to vector<166x8xf32>
    %c2_13 = arith.constant 2 : index
    %c0_14 = arith.constant 0 : index
    %c0_15 = arith.constant 0 : index
    %13 = vector.load %arg2[%c2_13, %c0_14, %c0_15] : memref<9x8x8xf32, #tpu.memory_space<vmem>>, vector<1x8x8xf32>
    %14 = vector.shape_cast %13 : vector<1x8x8xf32> to vector<8x8xf32>
    %cst_16 = arith.constant dense<0.000000e+00> : vector<8x166xf32>
    %15 = tpu.matmul %14, %12, %cst_16 {dimension_numbers = #tpu.dot_dimension_numbers<[1], [1], [0], [0], [0, 0, 1, 0], [], []>} : vector<8x8xf32>, vector<166x8xf32>, vector<8x166xf32> -> vector<8x166xf32>
    %16 = arith.addf %10, %15 : vector<8x166xf32>
    %c0_17 = arith.constant 0 : index
    %c14 = arith.constant 14 : index
    %c0_18 = arith.constant 0 : index
    %17 = vector.load %arg1[%c0_17, %c14, %c0_18] : memref<1x196x8xf32, #tpu.memory_space<vmem>>, vector<1x166x8xf32>
    %18 = vector.shape_cast %17 : vector<1x166x8xf32> to vector<166x8xf32>
    %c3 = arith.constant 3 : index
    %c0_19 = arith.constant 0 : index
    %c0_20 = arith.constant 0 : index
    %19 = vector.load %arg2[%c3, %c0_19, %c0_20] : memref<9x8x8xf32, #tpu.memory_space<vmem>>, vector<1x8x8xf32>
    %20 = vector.shape_cast %19 : vector<1x8x8xf32> to vector<8x8xf32>
    %cst_21 = arith.constant dense<0.000000e+00> : vector<8x166xf32>
    %21 = tpu.matmul %20, %18, %cst_21 {dimension_numbers = #tpu.dot_dimension_numbers<[1], [1], [0], [0], [0, 0, 1, 0], [], []>} : vector<8x8xf32>, vector<166x8xf32>, vector<8x166xf32> -> vector<8x166xf32>
    %22 = arith.addf %16, %21 : vector<8x166xf32>
    %c0_22 = arith.constant 0 : index
    %c15 = arith.constant 15 : index
    %c0_23 = arith.constant 0 : index
    %23 = vector.load %arg1[%c0_22, %c15, %c0_23] : memref<1x196x8xf32, #tpu.memory_space<vmem>>, vector<1x166x8xf32>
    %24 = vector.shape_cast %23 : vector<1x166x8xf32> to vector<166x8xf32>
    %c4 = arith.constant 4 : index
    %c0_24 = arith.constant 0 : index
    %c0_25 = arith.constant 0 : index
    %25 = vector.load %arg2[%c4, %c0_24, %c0_25] : memref<9x8x8xf32, #tpu.memory_space<vmem>>, vector<1x8x8xf32>
    %26 = vector.shape_cast %25 : vector<1x8x8xf32> to vector<8x8xf32>
    %cst_26 = arith.constant dense<0.000000e+00> : vector<8x166xf32>
    %27 = tpu.matmul %26, %24, %cst_26 {dimension_numbers = #tpu.dot_dimension_numbers<[1], [1], [0], [0], [0, 0, 1, 0], [], []>} : vector<8x8xf32>, vector<166x8xf32>, vector<8x166xf32> -> vector<8x166xf32>
    %28 = arith.addf %22, %27 : vector<8x166xf32>
    %c0_27 = arith.constant 0 : index
    %c16 = arith.constant 16 : index
    %c0_28 = arith.constant 0 : index
    %29 = vector.load %arg1[%c0_27, %c16, %c0_28] : memref<1x196x8xf32, #tpu.memory_space<vmem>>, vector<1x166x8xf32>
    %30 = vector.shape_cast %29 : vector<1x166x8xf32> to vector<166x8xf32>
    %c5 = arith.constant 5 : index
    %c0_29 = arith.constant 0 : index
    %c0_30 = arith.constant 0 : index
    %31 = vector.load %arg2[%c5, %c0_29, %c0_30] : memref<9x8x8xf32, #tpu.memory_space<vmem>>, vector<1x8x8xf32>
    %32 = vector.shape_cast %31 : vector<1x8x8xf32> to vector<8x8xf32>
    %cst_31 = arith.constant dense<0.000000e+00> : vector<8x166xf32>
    %33 = tpu.matmul %32, %30, %cst_31 {dimension_numbers = #tpu.dot_dimension_numbers<[1], [1], [0], [0], [0, 0, 1, 0], [], []>} : vector<8x8xf32>, vector<166x8xf32>, vector<8x166xf32> -> vector<8x166xf32>
    %34 = arith.addf %28, %33 : vector<8x166xf32>
    %c0_32 = arith.constant 0 : index
    %c28 = arith.constant 28 : index
    %c0_33 = arith.constant 0 : index
    %35 = vector.load %arg1[%c0_32, %c28, %c0_33] : memref<1x196x8xf32, #tpu.memory_space<vmem>>, vector<1x166x8xf32>
    %36 = vector.shape_cast %35 : vector<1x166x8xf32> to vector<166x8xf32>
    %c6 = arith.constant 6 : index
    %c0_34 = arith.constant 0 : index
    %c0_35 = arith.constant 0 : index
    %37 = vector.load %arg2[%c6, %c0_34, %c0_35] : memref<9x8x8xf32, #tpu.memory_space<vmem>>, vector<1x8x8xf32>
    %38 = vector.shape_cast %37 : vector<1x8x8xf32> to vector<8x8xf32>
    %cst_36 = arith.constant dense<0.000000e+00> : vector<8x166xf32>
    %39 = tpu.matmul %38, %36, %cst_36 {dimension_numbers = #tpu.dot_dimension_numbers<[1], [1], [0], [0], [0, 0, 1, 0], [], []>} : vector<8x8xf32>, vector<166x8xf32>, vector<8x166xf32> -> vector<8x166xf32>
    %40 = arith.addf %34, %39 : vector<8x166xf32>
    %c0_37 = arith.constant 0 : index
    %c29 = arith.constant 29 : index
    %c0_38 = arith.constant 0 : index
    %41 = vector.load %arg1[%c0_37, %c29, %c0_38] : memref<1x196x8xf32, #tpu.memory_space<vmem>>, vector<1x166x8xf32>
    %42 = vector.shape_cast %41 : vector<1x166x8xf32> to vector<166x8xf32>
    %c7 = arith.constant 7 : index
    %c0_39 = arith.constant 0 : index
    %c0_40 = arith.constant 0 : index
    %43 = vector.load %arg2[%c7, %c0_39, %c0_40] : memref<9x8x8xf32, #tpu.memory_space<vmem>>, vector<1x8x8xf32>
    %44 = vector.shape_cast %43 : vector<1x8x8xf32> to vector<8x8xf32>
    %cst_41 = arith.constant dense<0.000000e+00> : vector<8x166xf32>
    %45 = tpu.matmul %44, %42, %cst_41 {dimension_numbers = #tpu.dot_dimension_numbers<[1], [1], [0], [0], [0, 0, 1, 0], [], []>} : vector<8x8xf32>, vector<166x8xf32>, vector<8x166xf32> -> vector<8x166xf32>
    %46 = arith.addf %40, %45 : vector<8x166xf32>
    %c0_42 = arith.constant 0 : index
    %c30 = arith.constant 30 : index
    %c0_43 = arith.constant 0 : index
    %47 = vector.load %arg1[%c0_42, %c30, %c0_43] : memref<1x196x8xf32, #tpu.memory_space<vmem>>, vector<1x166x8xf32>
    %48 = vector.shape_cast %47 : vector<1x166x8xf32> to vector<166x8xf32>
    %c8 = arith.constant 8 : index
    %c0_44 = arith.constant 0 : index
    %c0_45 = arith.constant 0 : index
    %49 = vector.load %arg2[%c8, %c0_44, %c0_45] : memref<9x8x8xf32, #tpu.memory_space<vmem>>, vector<1x8x8xf32>
    %50 = vector.shape_cast %49 : vector<1x8x8xf32> to vector<8x8xf32>
    %cst_46 = arith.constant dense<0.000000e+00> : vector<8x166xf32>
    %51 = tpu.matmul %50, %48, %cst_46 {dimension_numbers = #tpu.dot_dimension_numbers<[1], [1], [0], [0], [0, 0, 1, 0], [], []>} : vector<8x8xf32>, vector<166x8xf32>, vector<8x166xf32> -> vector<8x166xf32>
    %52 = arith.addf %46, %51 : vector<8x166xf32>
    %c0_47 = arith.constant 0 : index
    %c0_48 = arith.constant 0 : index
    %53 = vector.load %arg3[%c0_47, %c0_48] : memref<8x1xf32, #tpu.memory_space<vmem>>, vector<8x1xf32>
    %54 = vector.broadcast %53 : vector<8x1xf32> to vector<8x166xf32>
    %55 = arith.addf %52, %54 : vector<8x166xf32>
    %c0_49 = arith.constant 0 : index
    %c0_50 = arith.constant 0 : index
    %56 = vector.load %arg4[%c0_49, %c0_50] : memref<1x166xf32, #tpu.memory_space<vmem>>, vector<1x166xf32>
    %57 = vector.broadcast %56 : vector<1x166xf32> to vector<8x166xf32>
    %58 = arith.mulf %55, %57 : vector<8x166xf32>
    %cst_51 = arith.constant dense<0.000000e+00> : vector<8xf32>
    %59 = vector.multi_reduction <add>, %58, %cst_51 [1] : vector<8x166xf32> to vector<8xf32>
    %60 = vector.shape_cast %59 : vector<8xf32> to vector<8x1xf32>
    %cst_52 = arith.constant 0.0069444445 : f32
    %61 = vector.broadcast %cst_52 : f32 to vector<8x1xf32>
    %62 = arith.mulf %60, %61 : vector<8x1xf32>
    %63 = vector.broadcast %62 : vector<8x1xf32> to vector<8x166xf32>
    %64 = arith.subf %55, %63 : vector<8x166xf32>
    %65 = arith.mulf %64, %64 : vector<8x166xf32>
    %66 = vector.broadcast %56 : vector<1x166xf32> to vector<8x166xf32>
    %67 = arith.mulf %65, %66 : vector<8x166xf32>
    %cst_53 = arith.constant dense<0.000000e+00> : vector<8xf32>
    %68 = vector.multi_reduction <add>, %67, %cst_53 [1] : vector<8x166xf32> to vector<8xf32>
    %69 = vector.shape_cast %68 : vector<8xf32> to vector<8x1xf32>
    %cst_54 = arith.constant 0.0069444445 : f32
    %70 = vector.broadcast %cst_54 : f32 to vector<8x1xf32>
    %71 = arith.mulf %69, %70 : vector<8x1xf32>
    %cst_55 = arith.constant 9.99999974E-6 : f32
    %72 = vector.broadcast %cst_55 : f32 to vector<8x1xf32>
    %73 = arith.addf %71, %72 : vector<8x1xf32>
    %74 = math.rsqrt %73 : vector<8x1xf32>
    %75 = vector.broadcast %74 : vector<8x1xf32> to vector<8x166xf32>
    %76 = arith.mulf %64, %75 : vector<8x166xf32>
    %cst_56 = arith.constant 0.000000e+00 : f32
    %77 = vector.broadcast %cst_56 : f32 to vector<8x166xf32>
    %78 = arith.maximumf %76, %77 : vector<8x166xf32>
    %c0_57 = arith.constant 0 : index
    %c0_58 = arith.constant 0 : index
    %c0_59 = arith.constant 0 : index
    %79 = vector.load %arg5[%c0_57, %c0_58, %c0_59] : memref<1x8x166xf32, #tpu.memory_space<vmem>>, vector<1x8x166xf32>
    %80 = vector.shape_cast %79 : vector<1x8x166xf32> to vector<8x166xf32>
    %81 = vector.shape_cast %78 : vector<8x166xf32> to vector<1x8x166xf32>
    tpu.vector_store %arg5[%c0_57, %c0_58, %c0_59], %81 {strides = array<i32>} : memref<1x8x166xf32, #tpu.memory_space<vmem>>, vector<1x8x166xf32>,
    return
  }
  func.func @transform_0(%arg0: i32) -> (i32, i32, i32) {
    %c0_i32 = arith.constant 0 : i32
    %c0_i32_0 = arith.constant 0 : i32
    %c0_i32_1 = arith.constant 0 : i32
    return %arg0, %c0_i32, %c0_i32_0 : i32, i32, i32
  }
  func.func @transform_1(%arg0: i32) -> (i32, i32, i32) {
    %c0_i32 = arith.constant 0 : i32
    %c0_i32_0 = arith.constant 0 : i32
    %c0_i32_1 = arith.constant 0 : i32
    %c0_i32_2 = arith.constant 0 : i32
    return %c0_i32, %c0_i32_0, %c0_i32_1 : i32, i32, i32
  }
  func.func @transform_2(%arg0: i32) -> (i32, i32) {
    %c0_i32 = arith.constant 0 : i32
    %c0_i32_0 = arith.constant 0 : i32
    %c0_i32_1 = arith.constant 0 : i32
    return %c0_i32, %c0_i32_0 : i32, i32
  }
  func.func @transform_3(%arg0: i32) -> (i32, i32) {
    %c0_i32 = arith.constant 0 : i32
    %c0_i32_0 = arith.constant 0 : i32
    %c0_i32_1 = arith.constant 0 : i32
    return %c0_i32, %c0_i32_0 : i32, i32
  }
  func.func @transform_4(%arg0: i32) -> (i32, i32, i32) {
    %c0_i32 = arith.constant 0 : i32
    %c0_i32_0 = arith.constant 0 : i32
    %c0_i32_1 = arith.constant 0 : i32
    return %arg0, %c0_i32, %c0_i32_0 : i32, i32, i32
  }
}

</mosaic_0001>

<llo_original>
// kernel: tpu_custom_call.1
$region0: #{tpu_custom_call.1}
  #allocation0 [shape = 'u32[]', space=smem, size = 0x4, offset = 0x4, fixed_abs, tag = 'smem constant byte address 0x4 - core index']
  #allocation1 [shape = 'u32[144,128]{1,0:T(1,128)}', space=vmem, size = 0x12000, scoped, tag = 'internal scratch']
  %s0 = inlined_call_operand.vmem [shape: f32[2,196,8], index: 0, kind: input, shape index: {}]
  %s1 = inlined_call_operand.vmem [shape: f32[9,8,8], index: 1, kind: input, shape index: {}]
  %s2 = inlined_call_operand.vmem [shape: f32[8,1], index: 2, kind: input, shape index: {}]
  %s3 = inlined_call_operand.vmem [shape: f32[1,166], index: 3, kind: input, shape index: {}]
  %s4 = inlined_call_operand.hbm [shape: f32[2,8,166], index: 4, kind: output, shape index: {}]
  %s5 = sld [smem:[#allocation0]]
  $region49: #{tpu_custom_call.1} parent=0
    _
  %s7 = ssub.s32 1, %s5
  %s8 = scalar_select 0, %s7, %s5
  $region1: #{tpu_custom_call.1} parent=0
    #allocation2 [shape = 'u8[16384]{0}', space=vmem, size = 0x4000, scoped, tag = 'output window, operand 0']
    #allocation3 [shape = 's32[2]{0}', space=sflag, size = 0x8, scoped, tag = 'scoped memory for tpu_custom_call.1']
    %9 = vsyncpa [#allocation3], 0
    %s10 = scalar_lea.sflag [#allocation3], 1
    %11 = vsyncpa %s10, 0
    loop: start=0, step=1, limit=4
    $region2: #{tpu_custom_call.1} parent=1 // loop_pre_header
      _
    $region3: #{tpu_custom_call.1} parent=1 // loop_header
      %s13 = sphi 0, %s17
      %p14 = scmp.ge.s32.totalorder %s13, 4
      %s23 = sphi 0, %s25
      %s26 = sphi 0, %s23
      %s27 = sphi 0, %s26
      %s43 = sphi 0, %s27
      %s47 = sphi 0, %s47
      %s49 = sphi 0, %s47
      %s50 = sphi 0, %s49
      %s64 = sphi 0, %s50
      %s68 = sphi 0, %s68
      %s70 = sphi 0, %s68
      %s71 = sphi 0, %s70
      %s85 = sphi 0, %s71
      %s89 = sphi 0, %s89
      %s91 = sphi 0, %s89
      %s92 = sphi 0, %s91
      %s106 = sphi 0, %s92
      %s112 = sphi 0, %s114
      %s115 = sphi 0, %s112
      %s116 = sphi 0, %s115
      %s132 = sphi 0, %s116
    $region4: #{tpu_custom_call.1} parent=1 // loop_header_branch
      %16 = sbr.rel (%p14) target = $region8
    $region5: #{tpu_custom_call.1} parent=1 // loop_body
      %s18 = ssub.s32 %s13, 1
      %s19 = ssub.s32 %s13, 2
      %s20 = sadd.s32 %s13, 1
      %s21 = ssub.s32 %s13, %s20
      %p22 = scmp.eq.s32.totalorder %s21, 0
      %s24 = sadd.s32 %s23, 1
      %s25 = scalar_select %p22, %s23, %s24
      %p28 = pneg %p22
      %p29 = scmp.eq.s32.totalorder %s13, 1
      %p30 = por %p28, %p29
      %p31 = scmp.ne.s32.totalorder %s23, %s26
      %p32 = scmp.eq.s32.totalorder %s13, 0
      %p33 = por %p31, %p32
      %p34 = scmp.ne.s32.totalorder %s23, %s26
      %p35 = scmp.eq.s32.totalorder %s18, 1
      %p36 = por %p34, %p35
      %p37 = scmp.ne.s32.totalorder %s26, %s27
      %p38 = scmp.eq.s32.totalorder %s18, 0
      %p39 = por %p37, %p38
      %p40 = scmp.ne.s32.totalorder %s26, %s27
      %p41 = scmp.eq.s32.totalorder %s19, 1
      %p42 = por %p40, %p41
      %p44 = scmp.ne.s32.totalorder %s27, %s43
      %p45 = scmp.eq.s32.totalorder %s19, 0
      %p46 = por %p44, %p45
      %s48 = sadd.s32 %s47, 1
      %p51 = scmp.eq.s32.totalorder %s13, 1
      %p52 = scmp.ne.s32.totalorder %s47, %s49
      %p53 = scmp.eq.s32.totalorder %s13, 0
      %p54 = por %p52, %p53
      %p55 = scmp.ne.s32.totalorder %s47, %s49
      %p56 = scmp.eq.s32.totalorder %s18, 1
      %p57 = por %p55, %p56
      %p58 = scmp.ne.s32.totalorder %s49, %s50
      %p59 = scmp.eq.s32.totalorder %s18, 0
      %p60 = por %p58, %p59
      %p61 = scmp.ne.s32.totalorder %s49, %s50
      %p62 = scmp.eq.s32.totalorder %s19, 1
      %p63 = por %p61, %p62
      %p65 = scmp.ne.s32.totalorder %s50, %s64
      %p66 = scmp.eq.s32.totalorder %s19, 0
      %p67 = por %p65, %p66
      %s69 = sadd.s32 %s68, 1
      %p72 = scmp.eq.s32.totalorder %s13, 1
      %p73 = scmp.ne.s32.totalorder %s68, %s70
      %p74 = scmp.eq.s32.totalorder %s13, 0
      %p75 = por %p73, %p74
      %p76 = scmp.ne.s32.totalorder %s68, %s70
      %p77 = scmp.eq.s32.totalorder %s18, 1
      %p78 = por %p76, %p77
      %p79 = scmp.ne.s32.totalorder %s70, %s71
      %p80 = scmp.eq.s32.totalorder %s18, 0
      %p81 = por %p79, %p80
      %p82 = scmp.ne.s32.totalorder %s70, %s71
      %p83 = scmp.eq.s32.totalorder %s19, 1
      %p84 = por %p82, %p83
      %p86 = scmp.ne.s32.totalorder %s71, %s85
      %p87 = scmp.eq.s32.totalorder %s19, 0
      %p88 = por %p86, %p87
      %s90 = sadd.s32 %s89, 1
      %p93 = scmp.eq.s32.totalorder %s13, 1
      %p94 = scmp.ne.s32.totalorder %s89, %s91
      %p95 = scmp.eq.s32.totalorder %s13, 0
      %p96 = por %p94, %p95
      %p97 = scmp.ne.s32.totalorder %s89, %s91
      %p98 = scmp.eq.s32.totalorder %s18, 1
      %p99 = por %p97, %p98
      %p100 = scmp.ne.s32.totalorder %s91, %s92
      %p101 = scmp.eq.s32.totalorder %s18, 0
      %p102 = por %p100, %p101
      %p103 = scmp.ne.s32.totalorder %s91, %s92
      %p104 = scmp.eq.s32.totalorder %s19, 1
      %p105 = por %p103, %p104
      %p107 = scmp.ne.s32.totalorder %s92, %s106
      %p108 = scmp.eq.s32.totalorder %s19, 0
      %p109 = por %p107, %p108
      %s110 = ssub.s32 %s13, %s20
      %p111 = scmp.eq.s32.totalorder %s110, 0
      %s113 = sadd.s32 %s112, 1
      %s114 = scalar_select %p111, %s112, %s113
      %p117 = pneg %p111
      %p118 = scmp.eq.s32.totalorder %s13, 1
      %p119 = por %p117, %p118
      %p120 = scmp.ne.s32.totalorder %s112, %s115
      %p121 = scmp.eq.s32.totalorder %s13, 0
      %p122 = por %p120, %p121
      %p123 = scmp.ne.s32.totalorder %s112, %s115
      %p124 = scmp.eq.s32.totalorder %s18, 1
      %p125 = por %p123, %p124
      %p126 = scmp.ne.s32.totalorder %s115, %s116
      %p127 = scmp.eq.s32.totalorder %s18, 0
      %p128 = por %p126, %p127
      %p129 = scmp.ne.s32.totalorder %s115, %s116
      %p130 = scmp.eq.s32.totalorder %s19, 1
      %p131 = por %p129, %p130
      %p133 = scmp.ne.s32.totalorder %s116, %s132
      %p134 = scmp.eq.s32.totalorder %s19, 0
      %p135 = por %p133, %p134
      %p136 = scmp.le.s32.totalorder 1, %s13
      %p137 = scmp.lt.s32.totalorder %s13, 3
      %p138 = pnand %p136, %p137
      %p139 = pneg %p138
      // Predicated region
      $region9: #{tpu_custom_call.1} parent=5 // pred_check
        _
      $region10: #{tpu_custom_call.1} parent=5 // pred_check_branch
        %141 = sbr.rel (%p138) target = $region12
      $region11: #{tpu_custom_call.1} parent=5 // pred_region
        %s142 = ssub.s32 %s13, 1
        // Predicated region
        $region13: #{tpu_custom_call.1} parent=11 // pred_check
          %p143 = pneg %p60
        $region14: #{tpu_custom_call.1} parent=11 // pred_check_branch
          %145 = sbr.rel (%p143) target = $region16
        $region15: #{tpu_custom_call.1} parent=11 // pred_region
          _
        $region16: #{tpu_custom_call.1} parent=11 // pred_fallthru
          _
        // Predicated region
        $region17: #{tpu_custom_call.1} parent=11 // pred_check
          %p146 = pneg %p81
        $region18: #{tpu_custom_call.1} parent=11 // pred_check_branch
          %148 = sbr.rel (%p146) target = $region20
        $region19: #{tpu_custom_call.1} parent=11 // pred_region
          _
        $region20: #{tpu_custom_call.1} parent=11 // pred_fallthru
          _
        // Predicated region
        $region21: #{tpu_custom_call.1} parent=11 // pred_check
          %p149 = pneg %p102
        $region22: #{tpu_custom_call.1} parent=11 // pred_check_branch
          %151 = sbr.rel (%p149) target = $region24
        $region23: #{tpu_custom_call.1} parent=11 // pred_region
          _
        $region24: #{tpu_custom_call.1} parent=11 // pred_fallthru
          _
      $region12: #{tpu_custom_call.1} parent=5 // pred_fallthru
        _
      %p152 = scmp.lt.s32.totalorder %s13, 2
      // Predicated region
      $region25: #{tpu_custom_call.1} parent=5 // pred_check
        %p153 = pneg %p152
      $region26: #{tpu_custom_call.1} parent=5 // pred_check_branch
        %155 = sbr.rel (%p153) target = $region28
      $region27: #{tpu_custom_call.1} parent=5 // pred_region
        // Predicated region
        $region29: #{tpu_custom_call.1} parent=27 // pred_check
          %p156 = pneg %p33
        $region30: #{tpu_custom_call.1} parent=27 // pred_check_branch
          %158 = sbr.rel (%p156) target = $region32
        $region31: #{tpu_custom_call.1} parent=27 // pred_region
          %p159 = scmp.lt.s32.totalorder %s13, 1
          %s160 = scalar_select %p159, %s13, 1
          %s161 = smul.addr %s160, 25
          %s162 = smul.addr %s161, 8
          %s163 = scalar_lea.vmem %s0, %s162
        $region32: #{tpu_custom_call.1} parent=27 // pred_fallthru
          _
      $region28: #{tpu_custom_call.1} parent=5 // pred_fallthru
        _
      %p164 = scmp.le.s32.totalorder 1, %s13
      %p165 = scmp.lt.s32.totalorder %s13, 3
      %p166 = pnand %p164, %p165
      %p167 = pneg %p166
      // Predicated region
      $region33: #{tpu_custom_call.1} parent=5 // pred_check
        _
      $region34: #{tpu_custom_call.1} parent=5 // pred_check_branch
        %169 = sbr.rel (%p166) target = $region36
      $region35: #{tpu_custom_call.1} parent=5 // pred_region
        %s170 = ssub.s32 %s13, 1
        %p171 = scmp.lt.s32.totalorder %s18, 1
        %s172 = scalar_select %p171, %s18, 1
        %s173 = smul.addr %s172, 25
        %s174 = smul.addr %s173, 8
        %s175 = scalar_lea.vmem %s0, %s174
        %p176 = pneg %p39
        %p177 = pneg %p36
        %p178 = pneg %p60
        %p179 = pneg %p57
        %p180 = pneg %p81
        %p181 = pneg %p78
        %p182 = pneg %p102
        %p183 = pneg %p99
        %p184 = pneg %p128
        %p185 = pneg %p125
        %s186 = sand.u32 %s115, 1
        %s187 = scalar_lea.sflag [#allocation3], %s186
        %s188 = sand.u32 %s115, 1
        %s189 = smul.addr %s188, 16
        %s190 = scalar_lea.vmem [#allocation2], %s189
        %p191 = scmp.lt.s32.totalorder %s18, 1
        %s192 = scalar_select %p191, %s18, 1
        %s193 = smul.addr %s192, 25
        %s194 = smul.addr %s193, 8
        %s195 = scalar_lea.vmem %s0, %s194
        %v196 = vld [vmem:[%s195] sm:$0xff]
        %v197 = vld [vmem:[%s195 + $0x8] sm:$0xff]
        %v198 = vld [vmem:[%s195 + $0x10] sm:$0xff]
        %v199 = vld [vmem:[%s195 + $0x18] sm:$0xff]
        %v200 = vld [vmem:[%s195 + $0x20] sm:$0xff]
        %v201 = vld [vmem:[%s195 + $0x28] sm:$0xff]
        %v202 = vld [vmem:[%s195 + $0x30] sm:$0xff]
        %v203 = vld [vmem:[%s195 + $0x38] sm:$0xff]
        %v204 = vld [vmem:[%s195 + $0x40] sm:$0xff]
        %v205 = vld [vmem:[%s195 + $0x48] sm:$0xff]
        %v206 = vld [vmem:[%s195 + $0x50] sm:$0xff]
        %v207 = vld [vmem:[%s195 + $0x58] sm:$0xff]
        %v208 = vld [vmem:[%s195 + $0x60] sm:$0xff]
        %v209 = vld [vmem:[%s195 + $0x68] sm:$0xff]
        %v210 = vld [vmem:[%s195 + $0x70] sm:$0xff]
        %v211 = vld [vmem:[%s195 + $0x78] sm:$0xff]
        %v212 = vld [vmem:[%s195 + $0x80] sm:$0xff]
        %v213 = vld [vmem:[%s195 + $0x88] sm:$0xff]
        %v214 = vld [vmem:[%s195 + $0x90] sm:$0xff]
        %v215 = vld [vmem:[%s195 + $0x98] sm:$0xff]
        %v216 = vld [vmem:[%s195 + $0xa0] sm:$0x3f]
        %v217 = vld [vmem:[%s1] sm:$0xff]
        %v218 = vld [vmem:[%s195 + $0x1] sm:$0xff]
        %v219 = vld [vmem:[%s195 + $0x9] sm:$0xff]
        %v220 = vld [vmem:[%s195 + $0x11] sm:$0xff]
        %v221 = vld [vmem:[%s195 + $0x19] sm:$0xff]
        %v222 = vld [vmem:[%s195 + $0x21] sm:$0xff]
        %v223 = vld [vmem:[%s195 + $0x29] sm:$0xff]
        %v224 = vld [vmem:[%s195 + $0x31] sm:$0xff]
        %v225 = vld [vmem:[%s195 + $0x39] sm:$0xff]
        %v226 = vld [vmem:[%s195 + $0x41] sm:$0xff]
        %v227 = vld [vmem:[%s195 + $0x49] sm:$0xff]
        %v228 = vld [vmem:[%s195 + $0x51] sm:$0xff]
        %v229 = vld [vmem:[%s195 + $0x59] sm:$0xff]
        %v230 = vld [vmem:[%s195 + $0x61] sm:$0xff]
        %v231 = vld [vmem:[%s195 + $0x69] sm:$0xff]
        %v232 = vld [vmem:[%s195 + $0x71] sm:$0xff]
        %v233 = vld [vmem:[%s195 + $0x79] sm:$0xff]
        %v234 = vld [vmem:[%s195 + $0x81] sm:$0xff]
        %v235 = vld [vmem:[%s195 + $0x89] sm:$0xff]
        %v236 = vld [vmem:[%s195 + $0x91] sm:$0xff]
        %v237 = vld [vmem:[%s195 + $0x99] sm:$0xff]
        %v238 = vld [vmem:[%s195 + $0xa1] sm:$0x3f]
        %s239 = scalar_lea.vmem %s1, 8
        %v240 = vld [vmem:[%s239] sm:$0xff]
        %vm241 = vcmask 64512
        %v243 = vsel %vm241, %v240, 0
        %v246 = vsel %vm241, %v218, 0
        %v249 = vsel %vm241, %v219, 0
        %v252 = vsel %vm241, %v220, 0
        %v255 = vsel %vm241, %v221, 0
        %v258 = vsel %vm241, %v222, 0
        %v261 = vsel %vm241, %v223, 0
        %v264 = vsel %vm241, %v224, 0
        %v267 = vsel %vm241, %v225, 0
        %v270 = vsel %vm241, %v226, 0
        %v273 = vsel %vm241, %v227, 0
        %v276 = vsel %vm241, %v228, 0
        %v279 = vsel %vm241, %v229, 0
        %v282 = vsel %vm241, %v230, 0
        %v285 = vsel %vm241, %v231, 0
        %v288 = vsel %vm241, %v232, 0
        %v291 = vsel %vm241, %v233, 0
        %v294 = vsel %vm241, %v234, 0
        %v297 = vsel %vm241, %v235, 0
        %v300 = vsel %vm241, %v236, 0
        %v303 = vsel %vm241, %v237, 0
        %v306 = vsel %vm241, %v238, 0
        %308 = vmatprep.subr.mxu0 0.0
        %309 = vmatpush1.xpose.msra.mxu0 %v291
        %310 = vmatprep.subr.mxu0 0.0
        %311 = vmatpush1.xpose.msra.mxu0 %v288
        %312 = vmatprep.subr.mxu0 0.0
        %313 = vmatpush1.xpose.msra.mxu0 %v285
        %314 = vmatprep.subr.mxu0 0.0
        %315 = vmatpush1.xpose.msra.mxu0 %v282
        %316 = vmatprep.subr.mxu0 0.0
        %317 = vmatpush1.xpose.msra.mxu0 %v279
        %318 = vmatprep.subr.mxu0 0.0
        %319 = vmatpush1.xpose.msra.mxu0 %v276
        %320 = vmatprep.subr.mxu0 0.0
        %321 = vmatpush1.xpose.msra.mxu0 %v273
        %322 = vmatprep.subr.mxu0 0.0
        %323 = vmatpush1.xpose.msra.mxu0 %v270
        %324 = vmatprep.subr.mxu0 0.0
        %325 = vmatpush1.xpose.msra.mxu0 %v267
        %326 = vmatprep.subr.mxu0 0.0
        %327 = vmatpush1.xpose.msra.mxu0 %v264
        %328 = vmatprep.subr.mxu0 0.0
        %329 = vmatpush1.xpose.msra.mxu0 %v261
        %330 = vmatprep.subr.mxu0 0.0
        %331 = vmatpush1.xpose.msra.mxu0 %v258
        %332 = vmatprep.subr.mxu0 0.0
        %333 = vmatpush1.xpose.msra.mxu0 %v255
        %334 = vmatprep.subr.mxu0 0.0
        %335 = vmatpush1.xpose.msra.mxu0 %v252
        %336 = vmatprep.subr.mxu0 0.0
        %337 = vmatpush1.xpose.msra.mxu0 %v249
        %338 = vmatprep.subr.mxu0 0.0
        %339 = vmatpush1.xpose.msra.mxu0 %v246
        %340 = vmatprep.subr.mxu0 0.0
        %341 = vmatpush2.xpose.msra.mxu0 0.0
        %342 = vmatprep.subr.mxu0 0.0
        %343 = vmatpush2.xpose.msra.mxu0 0.0
        %344 = vmatprep.subr.mxu0 0.0
        %345 = vmatpush2.xpose.msra.mxu0 0.0
        %346 = vmatprep.subr.mxu0 0.0
        %347 = vmatpush2.xpose.msra.mxu0 0.0
        %348 = vmatprep.subr.mxu0 0.0
        %349 = vmatpush2.xpose.msra.mxu0 0.0
        %350 = vmatprep.subr.mxu0 0.0
        %351 = vmatpush2.xpose.msra.mxu0 0.0
        %352 = vmatprep.subr.mxu0 0.0
        %353 = vmatpush2.xpose.msra.mxu0 0.0
        %354 = vmatprep.subr.mxu0 0.0
        %355 = vmatpush2.xpose.msra.mxu0 0.0
        %356 = vmatprep.subr.mxu0 0.0
        %357 = vmatpush2.xpose.msra.mxu0 0.0
        %358 = vmatprep.subr.mxu0 0.0
        %359 = vmatpush2.xpose.msra.mxu0 0.0
        %360 = vmatprep.subr.mxu0 0.0
        %361 = vmatpush2.xpose.msra.mxu0 0.0
        %362 = vmatprep.subr.mxu0 0.0
        %363 = vmatpush2.xpose.msra.mxu0 %v306
        %364 = vmatprep.subr.mxu0 0.0
        %365 = vmatpush2.xpose.msra.mxu0 %v303
        %366 = vmatprep.subr.mxu0 0.0
        %367 = vmatpush2.xpose.msra.mxu0 %v300
        %368 = vmatprep.subr.mxu0 0.0
        %369 = vmatpush2.xpose.msra.mxu0 %v297
        %370 = vmatprep.subr.mxu0 0.0
        %371 = vmatpush2.xpose.msra.mxu0 %v294
        %372 = vmatprep.mubr.f32.mxu0 0.0
        %373 = vmatmul.mubr.f32.gmra.mxu0 %v243
        %v374 = vpop.f32.mrf.mxu0
        %v375 = vadd.f32 0.0, %v374
        %v376 = vpop.f32.mrf.mxu0
        %v377 = vadd.f32 0.0, %v376
        %378 = vdwg.mxu0
        %v380 = vsel %vm241, %v217, 0
        %v383 = vsel %vm241, %v196, 0
        %v386 = vsel %vm241, %v197, 0
        %v389 = vsel %vm241, %v198, 0
        %v392 = vsel %vm241, %v199, 0
        %v395 = vsel %vm241, %v200, 0
        %v398 = vsel %vm241, %v201, 0
        %v401 = vsel %vm241, %v202, 0
        %v404 = vsel %vm241, %v203, 0
        %v407 = vsel %vm241, %v204, 0
        %v410 = vsel %vm241, %v205, 0
        %v413 = vsel %vm241, %v206, 0
        %v416 = vsel %vm241, %v207, 0
        %v419 = vsel %vm241, %v208, 0
        %v422 = vsel %vm241, %v209, 0
        %v425 = vsel %vm241, %v210, 0
        %v428 = vsel %vm241, %v211, 0
        %v431 = vsel %vm241, %v212, 0
        %v434 = vsel %vm241, %v213, 0
        %v437 = vsel %vm241, %v214, 0
        %v440 = vsel %vm241, %v215, 0
        %v443 = vsel %vm241, %v216, 0
        %445 = vmatprep.subr.mxu0 0.0
        %446 = vmatpush1.xpose.msra.mxu0 %v428
        %447 = vmatprep.subr.mxu0 0.0
        %448 = vmatpush1.xpose.msra.mxu0 %v425
        %449 = vmatprep.subr.mxu0 0.0
        %450 = vmatpush1.xpose.msra.mxu0 %v422
        %451 = vmatprep.subr.mxu0 0.0
        %452 = vmatpush1.xpose.msra.mxu0 %v419
        %453 = vmatprep.subr.mxu0 0.0
        %454 = vmatpush1.xpose.msra.mxu0 %v416
        %455 = vmatprep.subr.mxu0 0.0
        %456 = vmatpush1.xpose.msra.mxu0 %v413
        %457 = vmatprep.subr.mxu0 0.0
        %458 = vmatpush1.xpose.msra.mxu0 %v410
        %459 = vmatprep.subr.mxu0 0.0
        %460 = vmatpush1.xpose.msra.mxu0 %v407
        %461 = vmatprep.subr.mxu0 0.0
        %462 = vmatpush1.xpose.msra.mxu0 %v404
        %463 = vmatprep.subr.mxu0 0.0
        %464 = vmatpush1.xpose.msra.mxu0 %v401
        %465 = vmatprep.subr.mxu0 0.0
        %466 = vmatpush1.xpose.msra.mxu0 %v398
        %467 = vmatprep.subr.mxu0 0.0
        %468 = vmatpush1.xpose.msra.mxu0 %v395
        %469 = vmatprep.subr.mxu0 0.0
        %470 = vmatpush1.xpose.msra.mxu0 %v392
        %471 = vmatprep.subr.mxu0 0.0
        %472 = vmatpush1.xpose.msra.mxu0 %v389
        %473 = vmatprep.subr.mxu0 0.0
        %474 = vmatpush1.xpose.msra.mxu0 %v386
        %475 = vmatprep.subr.mxu0 0.0
        %476 = vmatpush1.xpose.msra.mxu0 %v383
        %477 = vmatprep.subr.mxu0 0.0
        %478 = vmatpush2.xpose.msra.mxu0 0.0
        %479 = vmatprep.subr.mxu0 0.0
        %480 = vmatpush2.xpose.msra.mxu0 0.0
        %481 = vmatprep.subr.mxu0 0.0
        %482 = vmatpush2.xpose.msra.mxu0 0.0
        %483 = vmatprep.subr.mxu0 0.0
        %484 = vmatpush2.xpose.msra.mxu0 0.0
        %485 = vmatprep.subr.mxu0 0.0
        %486 = vmatpush2.xpose.msra.mxu0 0.0
        %487 = vmatprep.subr.mxu0 0.0
        %488 = vmatpush2.xpose.msra.mxu0 0.0
        %489 = vmatprep.subr.mxu0 0.0
        %490 = vmatpush2.xpose.msra.mxu0 0.0
        %491 = vmatprep.subr.mxu0 0.0
        %492 = vmatpush2.xpose.msra.mxu0 0.0
        %493 = vmatprep.subr.mxu0 0.0
        %494 = vmatpush2.xpose.msra.mxu0 0.0
        %495 = vmatprep.subr.mxu0 0.0
        %496 = vmatpush2.xpose.msra.mxu0 0.0
        %497 = vmatprep.subr.mxu0 0.0
        %498 = vmatpush2.xpose.msra.mxu0 0.0
        %499 = vmatprep.subr.mxu0 0.0
        %500 = vmatpush2.xpose.msra.mxu0 %v443
        %501 = vmatprep.subr.mxu0 0.0
        %502 = vmatpush2.xpose.msra.mxu0 %v440
        %503 = vmatprep.subr.mxu0 0.0
        %504 = vmatpush2.xpose.msra.mxu0 %v437
        %505 = vmatprep.subr.mxu0 0.0
        %506 = vmatpush2.xpose.msra.mxu0 %v434
        %507 = vmatprep.subr.mxu0 0.0
        %508 = vmatpush2.xpose.msra.mxu0 %v431
        %509 = vmatprep.mubr.f32.mxu0 0.0
        %510 = vmatmul.mubr.f32.gmra.mxu0 %v380
        %v511 = vpop.f32.mrf.mxu0
        %v512 = vadd.f32 %v375, %v511
        %v513 = vpop.f32.mrf.mxu0
        %v514 = vadd.f32 %v377, %v513
        %515 = vdwg.mxu0
        %v516 = vld [vmem:[%s195 + $0x2] sm:$0xff]
        %v517 = vld [vmem:[%s195 + $0xa] sm:$0xff]
        %v518 = vld [vmem:[%s195 + $0x12] sm:$0xff]
        %v519 = vld [vmem:[%s195 + $0x1a] sm:$0xff]
        %v520 = vld [vmem:[%s195 + $0x22] sm:$0xff]
        %v521 = vld [vmem:[%s195 + $0x2a] sm:$0xff]
        %v522 = vld [vmem:[%s195 + $0x32] sm:$0xff]
        %v523 = vld [vmem:[%s195 + $0x3a] sm:$0xff]
        %v524 = vld [vmem:[%s195 + $0x42] sm:$0xff]
        %v525 = vld [vmem:[%s195 + $0x4a] sm:$0xff]
        %v526 = vld [vmem:[%s195 + $0x52] sm:$0xff]
        %v527 = vld [vmem:[%s195 + $0x5a] sm:$0xff]
        %v528 = vld [vmem:[%s195 + $0x62] sm:$0xff]
        %v529 = vld [vmem:[%s195 + $0x6a] sm:$0xff]
        %v530 = vld [vmem:[%s195 + $0x72] sm:$0xff]
        %v531 = vld [vmem:[%s195 + $0x7a] sm:$0xff]
        %v532 = vld [vmem:[%s195 + $0x82] sm:$0xff]
        %v533 = vld [vmem:[%s195 + $0x8a] sm:$0xff]
        %v534 = vld [vmem:[%s195 + $0x92] sm:$0xff]
        %v535 = vld [vmem:[%s195 + $0x9a] sm:$0xff]
        %v536 = vld [vmem:[%s195 + $0xa2] sm:$0x3f]
        %s537 = scalar_lea.vmem %s1, 16
        %v538 = vld [vmem:[%s537] sm:$0xff]
        %v540 = vsel %vm241, %v538, 0
        %v543 = vsel %vm241, %v516, 0
        %v546 = vsel %vm241, %v517, 0
        %v549 = vsel %vm241, %v518, 0
        %v552 = vsel %vm241, %v519, 0
        %v555 = vsel %vm241, %v520, 0
        %v558 = vsel %vm241, %v521, 0
        %v561 = vsel %vm241, %v522, 0
        %v564 = vsel %vm241, %v523, 0
        %v567 = vsel %vm241, %v524, 0
        %v570 = vsel %vm241, %v525, 0
        %v573 = vsel %vm241, %v526, 0
        %v576 = vsel %vm241, %v527, 0
        %v579 = vsel %vm241, %v528, 0
        %v582 = vsel %vm241, %v529, 0
        %v585 = vsel %vm241, %v530, 0
        %v588 = vsel %vm241, %v531, 0
        %v591 = vsel %vm241, %v532, 0
        %v594 = vsel %vm241, %v533, 0
        %v597 = vsel %vm241, %v534, 0
        %v600 = vsel %vm241, %v535, 0
        %v603 = vsel %vm241, %v536, 0
        %605 = vmatprep.subr.mxu0 0.0
        %606 = vmatpush1.xpose.msra.mxu0 %v588
        %607 = vmatprep.subr.mxu0 0.0
        %608 = vmatpush1.xpose.msra.mxu0 %v585
        %609 = vmatprep.subr.mxu0 0.0
        %610 = vmatpush1.xpose.msra.mxu0 %v582
        %611 = vmatprep.subr.mxu0 0.0
        %612 = vmatpush1.xpose.msra.mxu0 %v579
        %613 = vmatprep.subr.mxu0 0.0
        %614 = vmatpush1.xpose.msra.mxu0 %v576
        %615 = vmatprep.subr.mxu0 0.0
        %616 = vmatpush1.xpose.msra.mxu0 %v573
        %617 = vmatprep.subr.mxu0 0.0
        %618 = vmatpush1.xpose.msra.mxu0 %v570
        %619 = vmatprep.subr.mxu0 0.0
        %620 = vmatpush1.xpose.msra.mxu0 %v567
        %621 = vmatprep.subr.mxu0 0.0
        %622 = vmatpush1.xpose.msra.mxu0 %v564
        %623 = vmatprep.subr.mxu0 0.0
        %624 = vmatpush1.xpose.msra.mxu0 %v561
        %625 = vmatprep.subr.mxu0 0.0
        %626 = vmatpush1.xpose.msra.mxu0 %v558
        %627 = vmatprep.subr.mxu0 0.0
        %628 = vmatpush1.xpose.msra.mxu0 %v555
        %629 = vmatprep.subr.mxu0 0.0
        %630 = vmatpush1.xpose.msra.mxu0 %v552
        %631 = vmatprep.subr.mxu0 0.0
        %632 = vmatpush1.xpose.msra.mxu0 %v549
        %633 = vmatprep.subr.mxu0 0.0
        %634 = vmatpush1.xpose.msra.mxu0 %v546
        %635 = vmatprep.subr.mxu0 0.0
        %636 = vmatpush1.xpose.msra.mxu0 %v543
        %637 = vmatprep.subr.mxu0 0.0
        %638 = vmatpush2.xpose.msra.mxu0 0.0
        %639 = vmatprep.subr.mxu0 0.0
        %640 = vmatpush2.xpose.msra.mxu0 0.0
        %641 = vmatprep.subr.mxu0 0.0
        %642 = vmatpush2.xpose.msra.mxu0 0.0
        %643 = vmatprep.subr.mxu0 0.0
        %644 = vmatpush2.xpose.msra.mxu0 0.0
        %645 = vmatprep.subr.mxu0 0.0
        %646 = vmatpush2.xpose.msra.mxu0 0.0
        %647 = vmatprep.subr.mxu0 0.0
        %648 = vmatpush2.xpose.msra.mxu0 0.0
        %649 = vmatprep.subr.mxu0 0.0
        %650 = vmatpush2.xpose.msra.mxu0 0.0
        %651 = vmatprep.subr.mxu0 0.0
        %652 = vmatpush2.xpose.msra.mxu0 0.0
        %653 = vmatprep.subr.mxu0 0.0
        %654 = vmatpush2.xpose.msra.mxu0 0.0
        %655 = vmatprep.subr.mxu0 0.0
        %656 = vmatpush2.xpose.msra.mxu0 0.0
        %657 = vmatprep.subr.mxu0 0.0
        %658 = vmatpush2.xpose.msra.mxu0 0.0
        %659 = vmatprep.subr.mxu0 0.0
        %660 = vmatpush2.xpose.msra.mxu0 %v603
        %661 = vmatprep.subr.mxu0 0.0
        %662 = vmatpush2.xpose.msra.mxu0 %v600
        %663 = vmatprep.subr.mxu0 0.0
        %664 = vmatpush2.xpose.msra.mxu0 %v597
        %665 = vmatprep.subr.mxu0 0.0
        %666 = vmatpush2.xpose.msra.mxu0 %v594
        %667 = vmatprep.subr.mxu0 0.0
        %668 = vmatpush2.xpose.msra.mxu0 %v591
        %669 = vmatprep.mubr.f32.mxu0 0.0
        %670 = vmatmul.mubr.f32.gmra.mxu0 %v540
        %v671 = vpop.f32.mrf.mxu0
        %v672 = vadd.f32 0.0, %v671
        %v673 = vpop.f32.mrf.mxu0
        %v674 = vadd.f32 0.0, %v673
        %675 = vdwg.mxu0
        %v676 = vadd.f32 %v512, %v672
        %v677 = vadd.f32 %v514, %v674
        %v678 = vld [vmem:[%s195 + $0xe] sm:$0xff]
        %v679 = vld [vmem:[%s195 + $0x16] sm:$0xff]
        %v680 = vld [vmem:[%s195 + $0x1e] sm:$0xff]
        %v681 = vld [vmem:[%s195 + $0x26] sm:$0xff]
        %v682 = vld [vmem:[%s195 + $0x2e] sm:$0xff]
        %v683 = vld [vmem:[%s195 + $0x36] sm:$0xff]
        %v684 = vld [vmem:[%s195 + $0x3e] sm:$0xff]
        %v685 = vld [vmem:[%s195 + $0x46] sm:$0xff]
        %v686 = vld [vmem:[%s195 + $0x4e] sm:$0xff]
        %v687 = vld [vmem:[%s195 + $0x56] sm:$0xff]
        %v688 = vld [vmem:[%s195 + $0x5e] sm:$0xff]
        %v689 = vld [vmem:[%s195 + $0x66] sm:$0xff]
        %v690 = vld [vmem:[%s195 + $0x6e] sm:$0xff]
        %v691 = vld [vmem:[%s195 + $0x76] sm:$0xff]
        %v692 = vld [vmem:[%s195 + $0x7e] sm:$0xff]
        %v693 = vld [vmem:[%s195 + $0x86] sm:$0xff]
        %v694 = vld [vmem:[%s195 + $0x8e] sm:$0xff]
        %v695 = vld [vmem:[%s195 + $0x96] sm:$0xff]
        %v696 = vld [vmem:[%s195 + $0x9e] sm:$0xff]
        %v697 = vld [vmem:[%s195 + $0xa6] sm:$0xff]
        %v698 = vld [vmem:[%s195 + $0xae] sm:$0x3f]
        %s699 = scalar_lea.vmem %s1, 24
        %v700 = vld [vmem:[%s699] sm:$0xff]
        %v702 = vsel %vm241, %v700, 0
        %v705 = vsel %vm241, %v678, 0
        %v708 = vsel %vm241, %v679, 0
        %v711 = vsel %vm241, %v680, 0
        %v714 = vsel %vm241, %v681, 0
        %v717 = vsel %vm241, %v682, 0
        %v720 = vsel %vm241, %v683, 0
        %v723 = vsel %vm241, %v684, 0
        %v726 = vsel %vm241, %v685, 0
        %v729 = vsel %vm241, %v686, 0
        %v732 = vsel %vm241, %v687, 0
        %v735 = vsel %vm241, %v688, 0
        %v738 = vsel %vm241, %v689, 0
        %v741 = vsel %vm241, %v690, 0
        %v744 = vsel %vm241, %v691, 0
        %v747 = vsel %vm241, %v692, 0
        %v750 = vsel %vm241, %v693, 0
        %v753 = vsel %vm241, %v694, 0
        %v756 = vsel %vm241, %v695, 0
        %v759 = vsel %vm241, %v696, 0
        %v762 = vsel %vm241, %v697, 0
        %v765 = vsel %vm241, %v698, 0
        %767 = vmatprep.subr.mxu0 0.0
        %768 = vmatpush1.xpose.msra.mxu0 %v750
        %769 = vmatprep.subr.mxu0 0.0
        %770 = vmatpush1.xpose.msra.mxu0 %v747
        %771 = vmatprep.subr.mxu0 0.0
        %772 = vmatpush1.xpose.msra.mxu0 %v744
        %773 = vmatprep.subr.mxu0 0.0
        %774 = vmatpush1.xpose.msra.mxu0 %v741
        %775 = vmatprep.subr.mxu0 0.0
        %776 = vmatpush1.xpose.msra.mxu0 %v738
        %777 = vmatprep.subr.mxu0 0.0
        %778 = vmatpush1.xpose.msra.mxu0 %v735
        %779 = vmatprep.subr.mxu0 0.0
        %780 = vmatpush1.xpose.msra.mxu0 %v732
        %781 = vmatprep.subr.mxu0 0.0
        %782 = vmatpush1.xpose.msra.mxu0 %v729
        %783 = vmatprep.subr.mxu0 0.0
        %784 = vmatpush1.xpose.msra.mxu0 %v726
        %785 = vmatprep.subr.mxu0 0.0
        %786 = vmatpush1.xpose.msra.mxu0 %v723
        %787 = vmatprep.subr.mxu0 0.0
        %788 = vmatpush1.xpose.msra.mxu0 %v720
        %789 = vmatprep.subr.mxu0 0.0
        %790 = vmatpush1.xpose.msra.mxu0 %v717
        %791 = vmatprep.subr.mxu0 0.0
        %792 = vmatpush1.xpose.msra.mxu0 %v714
        %793 = vmatprep.subr.mxu0 0.0
        %794 = vmatpush1.xpose.msra.mxu0 %v711
        %795 = vmatprep.subr.mxu0 0.0
        %796 = vmatpush1.xpose.msra.mxu0 %v708
        %797 = vmatprep.subr.mxu0 0.0
        %798 = vmatpush1.xpose.msra.mxu0 %v705
        %799 = vmatprep.subr.mxu0 0.0
        %800 = vmatpush2.xpose.msra.mxu0 0.0
        %801 = vmatprep.subr.mxu0 0.0
        %802 = vmatpush2.xpose.msra.mxu0 0.0
        %803 = vmatprep.subr.mxu0 0.0
        %804 = vmatpush2.xpose.msra.mxu0 0.0
        %805 = vmatprep.subr.mxu0 0.0
        %806 = vmatpush2.xpose.msra.mxu0 0.0
        %807 = vmatprep.subr.mxu0 0.0
        %808 = vmatpush2.xpose.msra.mxu0 0.0
        %809 = vmatprep.subr.mxu0 0.0
        %810 = vmatpush2.xpose.msra.mxu0 0.0
        %811 = vmatprep.subr.mxu0 0.0
        %812 = vmatpush2.xpose.msra.mxu0 0.0
        %813 = vmatprep.subr.mxu0 0.0
        %814 = vmatpush2.xpose.msra.mxu0 0.0
        %815 = vmatprep.subr.mxu0 0.0
        %816 = vmatpush2.xpose.msra.mxu0 0.0
        %817 = vmatprep.subr.mxu0 0.0
        %818 = vmatpush2.xpose.msra.mxu0 0.0
        %819 = vmatprep.subr.mxu0 0.0
        %820 = vmatpush2.xpose.msra.mxu0 0.0
        %821 = vmatprep.subr.mxu0 0.0
        %822 = vmatpush2.xpose.msra.mxu0 %v765
        %823 = vmatprep.subr.mxu0 0.0
        %824 = vmatpush2.xpose.msra.mxu0 %v762
        %825 = vmatprep.subr.mxu0 0.0
        %826 = vmatpush2.xpose.msra.mxu0 %v759
        %827 = vmatprep.subr.mxu0 0.0
        %828 = vmatpush2.xpose.msra.mxu0 %v756
        %829 = vmatprep.subr.mxu0 0.0
        %830 = vmatpush2.xpose.msra.mxu0 %v753
        %831 = vmatprep.mubr.f32.mxu0 0.0
        %832 = vmatmul.mubr.f32.gmra.mxu0 %v702
        %v833 = vpop.f32.mrf.mxu0
        %v834 = vadd.f32 0.0, %v833
        %v835 = vpop.f32.mrf.mxu0
        %v836 = vadd.f32 0.0, %v835
        %837 = vdwg.mxu0
        %v838 = vadd.f32 %v676, %v834
        %v839 = vadd.f32 %v677, %v836
        %v840 = vld [vmem:[%s195 + $0xf] sm:$0xff]
        %v841 = vld [vmem:[%s195 + $0x17] sm:$0xff]
        %v842 = vld [vmem:[%s195 + $0x1f] sm:$0xff]
        %v843 = vld [vmem:[%s195 + $0x27] sm:$0xff]
        %v844 = vld [vmem:[%s195 + $0x2f] sm:$0xff]
        %v845 = vld [vmem:[%s195 + $0x37] sm:$0xff]
        %v846 = vld [vmem:[%s195 + $0x3f] sm:$0xff]
        %v847 = vld [vmem:[%s195 + $0x47] sm:$0xff]
        %v848 = vld [vmem:[%s195 + $0x4f] sm:$0xff]
        %v849 = vld [vmem:[%s195 + $0x57] sm:$0xff]
        %v850 = vld [vmem:[%s195 + $0x5f] sm:$0xff]
        %v851 = vld [vmem:[%s195 + $0x67] sm:$0xff]
        %v852 = vld [vmem:[%s195 + $0x6f] sm:$0xff]
        %v853 = vld [vmem:[%s195 + $0x77] sm:$0xff]
        %v854 = vld [vmem:[%s195 + $0x7f] sm:$0xff]
        %v855 = vld [vmem:[%s195 + $0x87] sm:$0xff]
        %v856 = vld [vmem:[%s195 + $0x8f] sm:$0xff]
        %v857 = vld [vmem:[%s195 + $0x97] sm:$0xff]
        %v858 = vld [vmem:[%s195 + $0x9f] sm:$0xff]
        %v859 = vld [vmem:[%s195 + $0xa7] sm:$0xff]
        %v860 = vld [vmem:[%s195 + $0xaf] sm:$0x3f]
        %s861 = scalar_lea.vmem %s1, 32
        %v862 = vld [vmem:[%s861] sm:$0xff]
        %v864 = vsel %vm241, %v862, 0
        %v867 = vsel %vm241, %v840, 0
        %v870 = vsel %vm241, %v841, 0
        %v873 = vsel %vm241, %v842, 0
        %v876 = vsel %vm241, %v843, 0
        %v879 = vsel %vm241, %v844, 0
        %v882 = vsel %vm241, %v845, 0
        %v885 = vsel %vm241, %v846, 0
        %v888 = vsel %vm241, %v847, 0
        %v891 = vsel %vm241, %v848, 0
        %v894 = vsel %vm241, %v849, 0
        %v897 = vsel %vm241, %v850, 0
        %v900 = vsel %vm241, %v851, 0
        %v903 = vsel %vm241, %v852, 0
        %v906 = vsel %vm241, %v853, 0
        %v909 = vsel %vm241, %v854, 0
        %v912 = vsel %vm241, %v855, 0
        %v915 = vsel %vm241, %v856, 0
        %v918 = vsel %vm241, %v857, 0
        %v921 = vsel %vm241, %v858, 0
        %v924 = vsel %vm241, %v859, 0
        %v927 = vsel %vm241, %v860, 0
        %929 = vmatprep.subr.mxu0 0.0
        %930 = vmatpush1.xpose.msra.mxu0 %v912
        %931 = vmatprep.subr.mxu0 0.0
        %932 = vmatpush1.xpose.msra.mxu0 %v909
        %933 = vmatprep.subr.mxu0 0.0
        %934 = vmatpush1.xpose.msra.mxu0 %v906
        %935 = vmatprep.subr.mxu0 0.0
        %936 = vmatpush1.xpose.msra.mxu0 %v903
        %937 = vmatprep.subr.mxu0 0.0
        %938 = vmatpush1.xpose.msra.mxu0 %v900
        %939 = vmatprep.subr.mxu0 0.0
        %940 = vmatpush1.xpose.msra.mxu0 %v897
        %941 = vmatprep.subr.mxu0 0.0
        %942 = vmatpush1.xpose.msra.mxu0 %v894
        %943 = vmatprep.subr.mxu0 0.0
        %944 = vmatpush1.xpose.msra.mxu0 %v891
        %945 = vmatprep.subr.mxu0 0.0
        %946 = vmatpush1.xpose.msra.mxu0 %v888
        %947 = vmatprep.subr.mxu0 0.0
        %948 = vmatpush1.xpose.msra.mxu0 %v885
        %949 = vmatprep.subr.mxu0 0.0
        %950 = vmatpush1.xpose.msra.mxu0 %v882
        %951 = vmatprep.subr.mxu0 0.0
        %952 = vmatpush1.xpose.msra.mxu0 %v879
        %953 = vmatprep.subr.mxu0 0.0
        %954 = vmatpush1.xpose.msra.mxu0 %v876
        %955 = vmatprep.subr.mxu0 0.0
        %956 = vmatpush1.xpose.msra.mxu0 %v873
        %957 = vmatprep.subr.mxu0 0.0
        %958 = vmatpush1.xpose.msra.mxu0 %v870
        %959 = vmatprep.subr.mxu0 0.0
        %960 = vmatpush1.xpose.msra.mxu0 %v867
        %961 = vmatprep.subr.mxu0 0.0
        %962 = vmatpush2.xpose.msra.mxu0 0.0
        %963 = vmatprep.subr.mxu0 0.0
        %964 = vmatpush2.xpose.msra.mxu0 0.0
        %965 = vmatprep.subr.mxu0 0.0
        %966 = vmatpush2.xpose.msra.mxu0 0.0
        %967 = vmatprep.subr.mxu0 0.0
        %968 = vmatpush2.xpose.msra.mxu0 0.0
        %969 = vmatprep.subr.mxu0 0.0
        %970 = vmatpush2.xpose.msra.mxu0 0.0
        %971 = vmatprep.subr.mxu0 0.0
        %972 = vmatpush2.xpose.msra.mxu0 0.0
        %973 = vmatprep.subr.mxu0 0.0
        %974 = vmatpush2.xpose.msra.mxu0 0.0
        %975 = vmatprep.subr.mxu0 0.0
        %976 = vmatpush2.xpose.msra.mxu0 0.0
        %977 = vmatprep.subr.mxu0 0.0
        %978 = vmatpush2.xpose.msra.mxu0 0.0
        %979 = vmatprep.subr.mxu0 0.0
        %980 = vmatpush2.xpose.msra.mxu0 0.0
        %981 = vmatprep.subr.mxu0 0.0
        %982 = vmatpush2.xpose.msra.mxu0 0.0
        %983 = vmatprep.subr.mxu0 0.0
        %984 = vmatpush2.xpose.msra.mxu0 %v927
        %985 = vmatprep.subr.mxu0 0.0
        %986 = vmatpush2.xpose.msra.mxu0 %v924
        %987 = vmatprep.subr.mxu0 0.0
        %988 = vmatpush2.xpose.msra.mxu0 %v921
        %989 = vmatprep.subr.mxu0 0.0
        %990 = vmatpush2.xpose.msra.mxu0 %v918
        %991 = vmatprep.subr.mxu0 0.0
        %992 = vmatpush2.xpose.msra.mxu0 %v915
        %993 = vmatprep.mubr.f32.mxu0 0.0
        %994 = vmatmul.mubr.f32.gmra.mxu0 %v864
        %v995 = vpop.f32.mrf.mxu0
        %v996 = vadd.f32 0.0, %v995
        %v997 = vpop.f32.mrf.mxu0
        %v998 = vadd.f32 0.0, %v997
        %999 = vdwg.mxu0
        %v1000 = vadd.f32 %v838, %v996
        %v1001 = vadd.f32 %v839, %v998
        %v1002 = vld [vmem:[%s195 + $0x10] sm:$0xff]
        %v1003 = vld [vmem:[%s195 + $0x18] sm:$0xff]
        %v1004 = vld [vmem:[%s195 + $0x20] sm:$0xff]
        %v1005 = vld [vmem:[%s195 + $0x28] sm:$0xff]
        %v1006 = vld [vmem:[%s195 + $0x30] sm:$0xff]
        %v1007 = vld [vmem:[%s195 + $0x38] sm:$0xff]
        %v1008 = vld [vmem:[%s195 + $0x40] sm:$0xff]
        %v1009 = vld [vmem:[%s195 + $0x48] sm:$0xff]
        %v1010 = vld [vmem:[%s195 + $0x50] sm:$0xff]
        %v1011 = vld [vmem:[%s195 + $0x58] sm:$0xff]
        %v1012 = vld [vmem:[%s195 + $0x60] sm:$0xff]
        %v1013 = vld [vmem:[%s195 + $0x68] sm:$0xff]
        %v1014 = vld [vmem:[%s195 + $0x70] sm:$0xff]
        %v1015 = vld [vmem:[%s195 + $0x78] sm:$0xff]
        %v1016 = vld [vmem:[%s195 + $0x80] sm:$0xff]
        %v1017 = vld [vmem:[%s195 + $0x88] sm:$0xff]
        %v1018 = vld [vmem:[%s195 + $0x90] sm:$0xff]
        %v1019 = vld [vmem:[%s195 + $0x98] sm:$0xff]
        %v1020 = vld [vmem:[%s195 + $0xa0] sm:$0xff]
        %v1021 = vld [vmem:[%s195 + $0xa8] sm:$0xff]
        %v1022 = vld [vmem:[%s195 + $0xb0] sm:$0x3f]
        %s1023 = scalar_lea.vmem %s1, 40
        %v1024 = vld [vmem:[%s1023] sm:$0xff]
        %v1026 = vsel %vm241, %v1024, 0
        %v1029 = vsel %vm241, %v1002, 0
        %v1032 = vsel %vm241, %v1003, 0
        %v1035 = vsel %vm241, %v1004, 0
        %v1038 = vsel %vm241, %v1005, 0
        %v1041 = vsel %vm241, %v1006, 0
        %v1044 = vsel %vm241, %v1007, 0
        %v1047 = vsel %vm241, %v1008, 0
        %v1050 = vsel %vm241, %v1009, 0
        %v1053 = vsel %vm241, %v1010, 0
        %v1056 = vsel %vm241, %v1011, 0
        %v1059 = vsel %vm241, %v1012, 0
        %v1062 = vsel %vm241, %v1013, 0
        %v1065 = vsel %vm241, %v1014, 0
        %v1068 = vsel %vm241, %v1015, 0
        %v1071 = vsel %vm241, %v1016, 0
        %v1074 = vsel %vm241, %v1017, 0
        %v1077 = vsel %vm241, %v1018, 0
        %v1080 = vsel %vm241, %v1019, 0
        %v1083 = vsel %vm241, %v1020, 0
        %v1086 = vsel %vm241, %v1021, 0
        %v1089 = vsel %vm241, %v1022, 0
        %1091 = vmatprep.subr.mxu0 0.0
        %1092 = vmatpush1.xpose.msra.mxu0 %v1074
        %1093 = vmatprep.subr.mxu0 0.0
        %1094 = vmatpush1.xpose.msra.mxu0 %v1071
        %1095 = vmatprep.subr.mxu0 0.0
        %1096 = vmatpush1.xpose.msra.mxu0 %v1068
        %1097 = vmatprep.subr.mxu0 0.0
        %1098 = vmatpush1.xpose.msra.mxu0 %v1065
        %1099 = vmatprep.subr.mxu0 0.0
        %1100 = vmatpush1.xpose.msra.mxu0 %v1062
        %1101 = vmatprep.subr.mxu0 0.0
        %1102 = vmatpush1.xpose.msra.mxu0 %v1059
        %1103 = vmatprep.subr.mxu0 0.0
        %1104 = vmatpush1.xpose.msra.mxu0 %v1056
        %1105 = vmatprep.subr.mxu0 0.0
        %1106 = vmatpush1.xpose.msra.mxu0 %v1053
        %1107 = vmatprep.subr.mxu0 0.0
        %1108 = vmatpush1.xpose.msra.mxu0 %v1050
        %1109 = vmatprep.subr.mxu0 0.0
        %1110 = vmatpush1.xpose.msra.mxu0 %v1047
        %1111 = vmatprep.subr.mxu0 0.0
        %1112 = vmatpush1.xpose.msra.mxu0 %v1044
        %1113 = vmatprep.subr.mxu0 0.0
        %1114 = vmatpush1.xpose.msra.mxu0 %v1041
        %1115 = vmatprep.subr.mxu0 0.0
        %1116 = vmatpush1.xpose.msra.mxu0 %v1038
        %1117 = vmatprep.subr.mxu0 0.0
        %1118 = vmatpush1.xpose.msra.mxu0 %v1035
        %1119 = vmatprep.subr.mxu0 0.0
        %1120 = vmatpush1.xpose.msra.mxu0 %v1032
        %1121 = vmatprep.subr.mxu0 0.0
        %1122 = vmatpush1.xpose.msra.mxu0 %v1029
        %1123 = vmatprep.subr.mxu0 0.0
        %1124 = vmatpush2.xpose.msra.mxu0 0.0
        %1125 = vmatprep.subr.mxu0 0.0
        %1126 = vmatpush2.xpose.msra.mxu0 0.0
        %1127 = vmatprep.subr.mxu0 0.0
        %1128 = vmatpush2.xpose.msra.mxu0 0.0
        %1129 = vmatprep.subr.mxu0 0.0
        %1130 = vmatpush2.xpose.msra.mxu0 0.0
        %1131 = vmatprep.subr.mxu0 0.0
        %1132 = vmatpush2.xpose.msra.mxu0 0.0
        %1133 = vmatprep.subr.mxu0 0.0
        %1134 = vmatpush2.xpose.msra.mxu0 0.0
        %1135 = vmatprep.subr.mxu0 0.0
        %1136 = vmatpush2.xpose.msra.mxu0 0.0
        %1137 = vmatprep.subr.mxu0 0.0
        %1138 = vmatpush2.xpose.msra.mxu0 0.0
        %1139 = vmatprep.subr.mxu0 0.0
        %1140 = vmatpush2.xpose.msra.mxu0 0.0
        %1141 = vmatprep.subr.mxu0 0.0
        %1142 = vmatpush2.xpose.msra.mxu0 0.0
        %1143 = vmatprep.subr.mxu0 0.0
        %1144 = vmatpush2.xpose.msra.mxu0 0.0
        %1145 = vmatprep.subr.mxu0 0.0
        %1146 = vmatpush2.xpose.msra.mxu0 %v1089
        %1147 = vmatprep.subr.mxu0 0.0
        %1148 = vmatpush2.xpose.msra.mxu0 %v1086
        %1149 = vmatprep.subr.mxu0 0.0
        %1150 = vmatpush2.xpose.msra.mxu0 %v1083
        %1151 = vmatprep.subr.mxu0 0.0
        %1152 = vmatpush2.xpose.msra.mxu0 %v1080
        %1153 = vmatprep.subr.mxu0 0.0
        %1154 = vmatpush2.xpose.msra.mxu0 %v1077
        %1155 = vmatprep.mubr.f32.mxu0 0.0
        %1156 = vmatmul.mubr.f32.gmra.mxu0 %v1026
        %v1157 = vpop.f32.mrf.mxu0
        %v1158 = vadd.f32 0.0, %v1157
        %v1159 = vpop.f32.mrf.mxu0
        %v1160 = vadd.f32 0.0, %v1159
        %1161 = vdwg.mxu0
        %v1162 = vadd.f32 %v1000, %v1158
        %v1163 = vadd.f32 %v1001, %v1160
        %v1164 = vld [vmem:[%s195 + $0x1c] sm:$0xff]
        %v1165 = vld [vmem:[%s195 + $0x24] sm:$0xff]
        %v1166 = vld [vmem:[%s195 + $0x2c] sm:$0xff]
        %v1167 = vld [vmem:[%s195 + $0x34] sm:$0xff]
        %v1168 = vld [vmem:[%s195 + $0x3c] sm:$0xff]
        %v1169 = vld [vmem:[%s195 + $0x44] sm:$0xff]
        %v1170 = vld [vmem:[%s195 + $0x4c] sm:$0xff]
        %v1171 = vld [vmem:[%s195 + $0x54] sm:$0xff]
        %v1172 = vld [vmem:[%s195 + $0x5c] sm:$0xff]
        %v1173 = vld [vmem:[%s195 + $0x64] sm:$0xff]
        %v1174 = vld [vmem:[%s195 + $0x6c] sm:$0xff]
        %v1175 = vld [vmem:[%s195 + $0x74] sm:$0xff]
        %v1176 = vld [vmem:[%s195 + $0x7c] sm:$0xff]
        %v1177 = vld [vmem:[%s195 + $0x84] sm:$0xff]
        %v1178 = vld [vmem:[%s195 + $0x8c] sm:$0xff]
        %v1179 = vld [vmem:[%s195 + $0x94] sm:$0xff]
        %v1180 = vld [vmem:[%s195 + $0x9c] sm:$0xff]
        %v1181 = vld [vmem:[%s195 + $0xa4] sm:$0xff]
        %v1182 = vld [vmem:[%s195 + $0xac] sm:$0xff]
        %v1183 = vld [vmem:[%s195 + $0xb4] sm:$0xff]
        %v1184 = vld [vmem:[%s195 + $0xbc] sm:$0x3f]
        %s1185 = scalar_lea.vmem %s1, 48
        %v1186 = vld [vmem:[%s1185] sm:$0xff]
        %v1188 = vsel %vm241, %v1186, 0
        %v1191 = vsel %vm241, %v1164, 0
        %v1194 = vsel %vm241, %v1165, 0
        %v1197 = vsel %vm241, %v1166, 0
        %v1200 = vsel %vm241, %v1167, 0
        %v1203 = vsel %vm241, %v1168, 0
        %v1206 = vsel %vm241, %v1169, 0
        %v1209 = vsel %vm241, %v1170, 0
        %v1212 = vsel %vm241, %v1171, 0
        %v1215 = vsel %vm241, %v1172, 0
        %v1218 = vsel %vm241, %v1173, 0
        %v1221 = vsel %vm241, %v1174, 0
        %v1224 = vsel %vm241, %v1175, 0
        %v1227 = vsel %vm241, %v1176, 0
        %v1230 = vsel %vm241, %v1177, 0
        %v1233 = vsel %vm241, %v1178, 0
        %v1236 = vsel %vm241, %v1179, 0
        %v1239 = vsel %vm241, %v1180, 0
        %v1242 = vsel %vm241, %v1181, 0
        %v1245 = vsel %vm241, %v1182, 0
        %v1248 = vsel %vm241, %v1183, 0
        %v1251 = vsel %vm241, %v1184, 0
        %1253 = vmatprep.subr.mxu0 0.0
        %1254 = vmatpush1.xpose.msra.mxu0 %v1236
        %1255 = vmatprep.subr.mxu0 0.0
        %1256 = vmatpush1.xpose.msra.mxu0 %v1233
        %1257 = vmatprep.subr.mxu0 0.0
        %1258 = vmatpush1.xpose.msra.mxu0 %v1230
        %1259 = vmatprep.subr.mxu0 0.0
        %1260 = vmatpush1.xpose.msra.mxu0 %v1227
        %1261 = vmatprep.subr.mxu0 0.0
        %1262 = vmatpush1.xpose.msra.mxu0 %v1224
        %1263 = vmatprep.subr.mxu0 0.0
        %1264 = vmatpush1.xpose.msra.mxu0 %v1221
        %1265 = vmatprep.subr.mxu0 0.0
        %1266 = vmatpush1.xpose.msra.mxu0 %v1218
        %1267 = vmatprep.subr.mxu0 0.0
        %1268 = vmatpush1.xpose.msra.mxu0 %v1215
        %1269 = vmatprep.subr.mxu0 0.0
        %1270 = vmatpush1.xpose.msra.mxu0 %v1212
        %1271 = vmatprep.subr.mxu0 0.0
        %1272 = vmatpush1.xpose.msra.mxu0 %v1209
        %1273 = vmatprep.subr.mxu0 0.0
        %1274 = vmatpush1.xpose.msra.mxu0 %v1206
        %1275 = vmatprep.subr.mxu0 0.0
        %1276 = vmatpush1.xpose.msra.mxu0 %v1203
        %1277 = vmatprep.subr.mxu0 0.0
        %1278 = vmatpush1.xpose.msra.mxu0 %v1200
        %1279 = vmatprep.subr.mxu0 0.0
        %1280 = vmatpush1.xpose.msra.mxu0 %v1197
        %1281 = vmatprep.subr.mxu0 0.0
        %1282 = vmatpush1.xpose.msra.mxu0 %v1194
        %1283 = vmatprep.subr.mxu0 0.0
        %1284 = vmatpush1.xpose.msra.mxu0 %v1191
        %1285 = vmatprep.subr.mxu0 0.0
        %1286 = vmatpush2.xpose.msra.mxu0 0.0
        %1287 = vmatprep.subr.mxu0 0.0
        %1288 = vmatpush2.xpose.msra.mxu0 0.0
        %1289 = vmatprep.subr.mxu0 0.0
        %1290 = vmatpush2.xpose.msra.mxu0 0.0
        %1291 = vmatprep.subr.mxu0 0.0
        %1292 = vmatpush2.xpose.msra.mxu0 0.0
        %1293 = vmatprep.subr.mxu0 0.0
        %1294 = vmatpush2.xpose.msra.mxu0 0.0
        %1295 = vmatprep.subr.mxu0 0.0
        %1296 = vmatpush2.xpose.msra.mxu0 0.0
        %1297 = vmatprep.subr.mxu0 0.0
        %1298 = vmatpush2.xpose.msra.mxu0 0.0
        %1299 = vmatprep.subr.mxu0 0.0
        %1300 = vmatpush2.xpose.msra.mxu0 0.0
        %1301 = vmatprep.subr.mxu0 0.0
        %1302 = vmatpush2.xpose.msra.mxu0 0.0
        %1303 = vmatprep.subr.mxu0 0.0
        %1304 = vmatpush2.xpose.msra.mxu0 0.0
        %1305 = vmatprep.subr.mxu0 0.0
        %1306 = vmatpush2.xpose.msra.mxu0 0.0
        %1307 = vmatprep.subr.mxu0 0.0
        %1308 = vmatpush2.xpose.msra.mxu0 %v1251
        %1309 = vmatprep.subr.mxu0 0.0
        %1310 = vmatpush2.xpose.msra.mxu0 %v1248
        %1311 = vmatprep.subr.mxu0 0.0
        %1312 = vmatpush2.xpose.msra.mxu0 %v1245
        %1313 = vmatprep.subr.mxu0 0.0
        %1314 = vmatpush2.xpose.msra.mxu0 %v1242
        %1315 = vmatprep.subr.mxu0 0.0
        %1316 = vmatpush2.xpose.msra.mxu0 %v1239
        %1317 = vmatprep.mubr.f32.mxu0 0.0
        %1318 = vmatmul.mubr.f32.gmra.mxu0 %v1188
        %v1319 = vpop.f32.mrf.mxu0
        %v1320 = vadd.f32 0.0, %v1319
        %v1321 = vpop.f32.mrf.mxu0
        %v1322 = vadd.f32 0.0, %v1321
        %1323 = vdwg.mxu0
        %v1324 = vadd.f32 %v1162, %v1320
        %v1325 = vadd.f32 %v1163, %v1322
        %v1326 = vld [vmem:[%s195 + $0x1d] sm:$0xff]
        %v1327 = vld [vmem:[%s195 + $0x25] sm:$0xff]
        %v1328 = vld [vmem:[%s195 + $0x2d] sm:$0xff]
        %v1329 = vld [vmem:[%s195 + $0x35] sm:$0xff]
        %v1330 = vld [vmem:[%s195 + $0x3d] sm:$0xff]
        %v1331 = vld [vmem:[%s195 + $0x45] sm:$0xff]
        %v1332 = vld [vmem:[%s195 + $0x4d] sm:$0xff]
        %v1333 = vld [vmem:[%s195 + $0x55] sm:$0xff]
        %v1334 = vld [vmem:[%s195 + $0x5d] sm:$0xff]
        %v1335 = vld [vmem:[%s195 + $0x65] sm:$0xff]
        %v1336 = vld [vmem:[%s195 + $0x6d] sm:$0xff]
        %v1337 = vld [vmem:[%s195 + $0x75] sm:$0xff]
        %v1338 = vld [vmem:[%s195 + $0x7d] sm:$0xff]
        %v1339 = vld [vmem:[%s195 + $0x85] sm:$0xff]
        %v1340 = vld [vmem:[%s195 + $0x8d] sm:$0xff]
        %v1341 = vld [vmem:[%s195 + $0x95] sm:$0xff]
        %v1342 = vld [vmem:[%s195 + $0x9d] sm:$0xff]
        %v1343 = vld [vmem:[%s195 + $0xa5] sm:$0xff]
        %v1344 = vld [vmem:[%s195 + $0xad] sm:$0xff]
        %v1345 = vld [vmem:[%s195 + $0xb5] sm:$0xff]
        %v1346 = vld [vmem:[%s195 + $0xbd] sm:$0x3f]
        %s1347 = scalar_lea.vmem %s1, 56
        %v1348 = vld [vmem:[%s1347] sm:$0xff]
        %v1350 = vsel %vm241, %v1348, 0
        %v1353 = vsel %vm241, %v1326, 0
        %v1356 = vsel %vm241, %v1327, 0
        %v1359 = vsel %vm241, %v1328, 0
        %v1362 = vsel %vm241, %v1329, 0
        %v1365 = vsel %vm241, %v1330, 0
        %v1368 = vsel %vm241, %v1331, 0
        %v1371 = vsel %vm241, %v1332, 0
        %v1374 = vsel %vm241, %v1333, 0
        %v1377 = vsel %vm241, %v1334, 0
        %v1380 = vsel %vm241, %v1335, 0
        %v1383 = vsel %vm241, %v1336, 0
        %v1386 = vsel %vm241, %v1337, 0
        %v1389 = vsel %vm241, %v1338, 0
        %v1392 = vsel %vm241, %v1339, 0
        %v1395 = vsel %vm241, %v1340, 0
        %v1398 = vsel %vm241, %v1341, 0
        %v1401 = vsel %vm241, %v1342, 0
        %v1404 = vsel %vm241, %v1343, 0
        %v1407 = vsel %vm241, %v1344, 0
        %v1410 = vsel %vm241, %v1345, 0
        %v1413 = vsel %vm241, %v1346, 0
        %1415 = vmatprep.subr.mxu0 0.0
        %1416 = vmatpush1.xpose.msra.mxu0 %v1398
        %1417 = vmatprep.subr.mxu0 0.0
        %1418 = vmatpush1.xpose.msra.mxu0 %v1395
        %1419 = vmatprep.subr.mxu0 0.0
        %1420 = vmatpush1.xpose.msra.mxu0 %v1392
        %1421 = vmatprep.subr.mxu0 0.0
        %1422 = vmatpush1.xpose.msra.mxu0 %v1389
        %1423 = vmatprep.subr.mxu0 0.0
        %1424 = vmatpush1.xpose.msra.mxu0 %v1386
        %1425 = vmatprep.subr.mxu0 0.0
        %1426 = vmatpush1.xpose.msra.mxu0 %v1383
        %1427 = vmatprep.subr.mxu0 0.0
        %1428 = vmatpush1.xpose.msra.mxu0 %v1380
        %1429 = vmatprep.subr.mxu0 0.0
        %1430 = vmatpush1.xpose.msra.mxu0 %v1377
        %1431 = vmatprep.subr.mxu0 0.0
        %1432 = vmatpush1.xpose.msra.mxu0 %v1374
        %1433 = vmatprep.subr.mxu0 0.0
        %1434 = vmatpush1.xpose.msra.mxu0 %v1371
        %1435 = vmatprep.subr.mxu0 0.0
        %1436 = vmatpush1.xpose.msra.mxu0 %v1368
        %1437 = vmatprep.subr.mxu0 0.0
        %1438 = vmatpush1.xpose.msra.mxu0 %v1365
        %1439 = vmatprep.subr.mxu0 0.0
        %1440 = vmatpush1.xpose.msra.mxu0 %v1362
        %1441 = vmatprep.subr.mxu0 0.0
        %1442 = vmatpush1.xpose.msra.mxu0 %v1359
        %1443 = vmatprep.subr.mxu0 0.0
        %1444 = vmatpush1.xpose.msra.mxu0 %v1356
        %1445 = vmatprep.subr.mxu0 0.0
        %1446 = vmatpush1.xpose.msra.mxu0 %v1353
        %1447 = vmatprep.subr.mxu0 0.0
        %1448 = vmatpush2.xpose.msra.mxu0 0.0
        %1449 = vmatprep.subr.mxu0 0.0
        %1450 = vmatpush2.xpose.msra.mxu0 0.0
        %1451 = vmatprep.subr.mxu0 0.0
        %1452 = vmatpush2.xpose.msra.mxu0 0.0
        %1453 = vmatprep.subr.mxu0 0.0
        %1454 = vmatpush2.xpose.msra.mxu0 0.0
        %1455 = vmatprep.subr.mxu0 0.0
        %1456 = vmatpush2.xpose.msra.mxu0 0.0
        %1457 = vmatprep.subr.mxu0 0.0
        %1458 = vmatpush2.xpose.msra.mxu0 0.0
        %1459 = vmatprep.subr.mxu0 0.0
        %1460 = vmatpush2.xpose.msra.mxu0 0.0
        %1461 = vmatprep.subr.mxu0 0.0
        %1462 = vmatpush2.xpose.msra.mxu0 0.0
        %1463 = vmatprep.subr.mxu0 0.0
        %1464 = vmatpush2.xpose.msra.mxu0 0.0
        %1465 = vmatprep.subr.mxu0 0.0
        %1466 = vmatpush2.xpose.msra.mxu0 0.0
        %1467 = vmatprep.subr.mxu0 0.0
        %1468 = vmatpush2.xpose.msra.mxu0 0.0
        %1469 = vmatprep.subr.mxu0 0.0
        %1470 = vmatpush2.xpose.msra.mxu0 %v1413
        %1471 = vmatprep.subr.mxu0 0.0
        %1472 = vmatpush2.xpose.msra.mxu0 %v1410
        %1473 = vmatprep.subr.mxu0 0.0
        %1474 = vmatpush2.xpose.msra.mxu0 %v1407
        %1475 = vmatprep.subr.mxu0 0.0
        %1476 = vmatpush2.xpose.msra.mxu0 %v1404
        %1477 = vmatprep.subr.mxu0 0.0
        %1478 = vmatpush2.xpose.msra.mxu0 %v1401
        %1479 = vmatprep.mubr.f32.mxu0 0.0
        %1480 = vmatmul.mubr.f32.gmra.mxu0 %v1350
        %v1481 = vpop.f32.mrf.mxu0
        %v1482 = vadd.f32 0.0, %v1481
        %v1483 = vpop.f32.mrf.mxu0
        %v1484 = vadd.f32 0.0, %v1483
        %1485 = vdwg.mxu0
        %v1486 = vadd.f32 %v1324, %v1482
        %v1487 = vadd.f32 %v1325, %v1484
        %v1488 = vld [vmem:[%s195 + $0x1e] sm:$0xff]
        %v1489 = vld [vmem:[%s195 + $0x26] sm:$0xff]
        %v1490 = vld [vmem:[%s195 + $0x2e] sm:$0xff]
        %v1491 = vld [vmem:[%s195 + $0x36] sm:$0xff]
        %v1492 = vld [vmem:[%s195 + $0x3e] sm:$0xff]
        %v1493 = vld [vmem:[%s195 + $0x46] sm:$0xff]
        %v1494 = vld [vmem:[%s195 + $0x4e] sm:$0xff]
        %v1495 = vld [vmem:[%s195 + $0x56] sm:$0xff]
        %v1496 = vld [vmem:[%s195 + $0x5e] sm:$0xff]
        %v1497 = vld [vmem:[%s195 + $0x66] sm:$0xff]
        %v1498 = vld [vmem:[%s195 + $0x6e] sm:$0xff]
        %v1499 = vld [vmem:[%s195 + $0x76] sm:$0xff]
        %v1500 = vld [vmem:[%s195 + $0x7e] sm:$0xff]
        %v1501 = vld [vmem:[%s195 + $0x86] sm:$0xff]
        %v1502 = vld [vmem:[%s195 + $0x8e] sm:$0xff]
        %v1503 = vld [vmem:[%s195 + $0x96] sm:$0xff]
        %v1504 = vld [vmem:[%s195 + $0x9e] sm:$0xff]
        %v1505 = vld [vmem:[%s195 + $0xa6] sm:$0xff]
        %v1506 = vld [vmem:[%s195 + $0xae] sm:$0xff]
        %v1507 = vld [vmem:[%s195 + $0xb6] sm:$0xff]
        %v1508 = vld [vmem:[%s195 + $0xbe] sm:$0x3f]
        %s1509 = scalar_lea.vmem %s1, 64
        %v1510 = vld [vmem:[%s1509] sm:$0xff]
        %v1512 = vsel %vm241, %v1510, 0
        %v1515 = vsel %vm241, %v1488, 0
        %v1518 = vsel %vm241, %v1489, 0
        %v1521 = vsel %vm241, %v1490, 0
        %v1524 = vsel %vm241, %v1491, 0
        %v1527 = vsel %vm241, %v1492, 0
        %v1530 = vsel %vm241, %v1493, 0
        %v1533 = vsel %vm241, %v1494, 0
        %v1536 = vsel %vm241, %v1495, 0
        %v1539 = vsel %vm241, %v1496, 0
        %v1542 = vsel %vm241, %v1497, 0
        %v1545 = vsel %vm241, %v1498, 0
        %v1548 = vsel %vm241, %v1499, 0
        %v1551 = vsel %vm241, %v1500, 0
        %v1554 = vsel %vm241, %v1501, 0
        %v1557 = vsel %vm241, %v1502, 0
        %v1560 = vsel %vm241, %v1503, 0
        %v1563 = vsel %vm241, %v1504, 0
        %v1566 = vsel %vm241, %v1505, 0
        %v1569 = vsel %vm241, %v1506, 0
        %v1572 = vsel %vm241, %v1507, 0
        %v1575 = vsel %vm241, %v1508, 0
        %1577 = vmatprep.subr.mxu0 0.0
        %1578 = vmatpush1.xpose.msra.mxu0 %v1560
        %1579 = vmatprep.subr.mxu0 0.0
        %1580 = vmatpush1.xpose.msra.mxu0 %v1557
        %1581 = vmatprep.subr.mxu0 0.0
        %1582 = vmatpush1.xpose.msra.mxu0 %v1554
        %1583 = vmatprep.subr.mxu0 0.0
        %1584 = vmatpush1.xpose.msra.mxu0 %v1551
        %1585 = vmatprep.subr.mxu0 0.0
        %1586 = vmatpush1.xpose.msra.mxu0 %v1548
        %1587 = vmatprep.subr.mxu0 0.0
        %1588 = vmatpush1.xpose.msra.mxu0 %v1545
        %1589 = vmatprep.subr.mxu0 0.0
        %1590 = vmatpush1.xpose.msra.mxu0 %v1542
        %1591 = vmatprep.subr.mxu0 0.0
        %1592 = vmatpush1.xpose.msra.mxu0 %v1539
        %1593 = vmatprep.subr.mxu0 0.0
        %1594 = vmatpush1.xpose.msra.mxu0 %v1536
        %1595 = vmatprep.subr.mxu0 0.0
        %1596 = vmatpush1.xpose.msra.mxu0 %v1533
        %1597 = vmatprep.subr.mxu0 0.0
        %1598 = vmatpush1.xpose.msra.mxu0 %v1530
        %1599 = vmatprep.subr.mxu0 0.0
        %1600 = vmatpush1.xpose.msra.mxu0 %v1527
        %1601 = vmatprep.subr.mxu0 0.0
        %1602 = vmatpush1.xpose.msra.mxu0 %v1524
        %1603 = vmatprep.subr.mxu0 0.0
        %1604 = vmatpush1.xpose.msra.mxu0 %v1521
        %1605 = vmatprep.subr.mxu0 0.0
        %1606 = vmatpush1.xpose.msra.mxu0 %v1518
        %1607 = vmatprep.subr.mxu0 0.0
        %1608 = vmatpush1.xpose.msra.mxu0 %v1515
        %1609 = vmatprep.subr.mxu0 0.0
        %1610 = vmatpush2.xpose.msra.mxu0 0.0
        %1611 = vmatprep.subr.mxu0 0.0
        %1612 = vmatpush2.xpose.msra.mxu0 0.0
        %1613 = vmatprep.subr.mxu0 0.0
        %1614 = vmatpush2.xpose.msra.mxu0 0.0
        %1615 = vmatprep.subr.mxu0 0.0
        %1616 = vmatpush2.xpose.msra.mxu0 0.0
        %1617 = vmatprep.subr.mxu0 0.0
        %1618 = vmatpush2.xpose.msra.mxu0 0.0
        %1619 = vmatprep.subr.mxu0 0.0
        %1620 = vmatpush2.xpose.msra.mxu0 0.0
        %1621 = vmatprep.subr.mxu0 0.0
        %1622 = vmatpush2.xpose.msra.mxu0 0.0
        %1623 = vmatprep.subr.mxu0 0.0
        %1624 = vmatpush2.xpose.msra.mxu0 0.0
        %1625 = vmatprep.subr.mxu0 0.0
        %1626 = vmatpush2.xpose.msra.mxu0 0.0
        %1627 = vmatprep.subr.mxu0 0.0
        %1628 = vmatpush2.xpose.msra.mxu0 0.0
        %1629 = vmatprep.subr.mxu0 0.0
        %1630 = vmatpush2.xpose.msra.mxu0 0.0
        %1631 = vmatprep.subr.mxu0 0.0
        %1632 = vmatpush2.xpose.msra.mxu0 %v1575
        %1633 = vmatprep.subr.mxu0 0.0
        %1634 = vmatpush2.xpose.msra.mxu0 %v1572
        %1635 = vmatprep.subr.mxu0 0.0
        %1636 = vmatpush2.xpose.msra.mxu0 %v1569
        %1637 = vmatprep.subr.mxu0 0.0
        %1638 = vmatpush2.xpose.msra.mxu0 %v1566
        %1639 = vmatprep.subr.mxu0 0.0
        %1640 = vmatpush2.xpose.msra.mxu0 %v1563
        %1641 = vmatprep.mubr.f32.mxu0 0.0
        %1642 = vmatmul.mubr.f32.gmra.mxu0 %v1512
        %v1643 = vpop.f32.mrf.mxu0
        %v1644 = vadd.f32 0.0, %v1643
        %v1645 = vpop.f32.mrf.mxu0
        %v1646 = vadd.f32 0.0, %v1645
        %1647 = vdwg.mxu0
        %v1648 = vadd.f32 %v1486, %v1644
        %v1649 = vadd.f32 %v1487, %v1646
        %v1650 = vld [vmem:[%s2] sm:$0xff]
        %1652 = vset.pattern.permute.xlu0 0
        %1653 = vperm.xlu0 %1652, %v1650
        %v1654 = vpop.permute.xlu0 %1653
        %v1656 = vadd.f32 %v1648, %v1654
        %v1657 = vadd.f32 %v1649, %v1654
        %v1658 = vld [vmem:[%s3] sm:$0x3]
        %v1660 = vlaneseq
        %v1661 = vshrl.u32 %v1660, 7
        %v1662 = vsub.s32 0, %v1661
        %v1663 = vrot.slane %v1658, %v1662
        %v1664 = vlaneseq
        %v1665 = vshrl.u32 %v1664, 7
        %v1666 = vsub.s32 1, %v1665
        %v1667 = vrot.slane %v1658, %v1666
        %v1670 = vmul.f32 %v1656, %v1663
        %v1671 = vmul.f32 %v1657, %v1667
        %vm1672 = vcmask 310272
        %v1673 = vsel %vm1672, %v1671, 0.0
        %v1674 = vadd.f32 %v1670, %v1673
        %1675 = vadd.xlane.f32.xlu0 %v1674
        %v1676 = vpop.xlane.xlu0 %1675
        %v1677 = vmul.f32 %v1676, 0.0069444445
        %v1678 = vsub.f32 %v1656, %v1677
        %v1679 = vsub.f32 %v1657, %v1677
        %v1680 = vmul.f32 %v1678, %v1678
        %v1681 = vmul.f32 %v1679, %v1679
        %v1682 = vmul.f32 %v1680, %v1663
        %v1683 = vmul.f32 %v1681, %v1667
        %v1684 = vsel %vm1672, %v1683, 0.0
        %v1685 = vadd.f32 %v1682, %v1684
        %1686 = vadd.xlane.f32.xlu0 %v1685
        %v1687 = vpop.xlane.xlu0 %1686
        %v1688 = vmul.f32 %v1687, 0.0069444445
        %v1689 = vadd.f32 %v1688, 1e-05
        %v1690 = vrsqrt.pop %v1689
        %v1691 = vmul.f32 %v1678, %v1690
        %v1692 = vmul.f32 %v1679, %v1690
        %v1693 = vmax.f32 %v1691, 0.0
        %v1694 = vmax.f32 %v1692, 0.0
        %1695 = vst [vmem:[%s190] sm:$0xff] %v1693
        %1696 = vst.msk [vmem:[%s190 + $0x8] sm:$0xff] %vm1672, %v1694
        %s1697 = sand.u32 %s115, 1
        %s1698 = scalar_lea.sflag [#allocation3], %s1697
        %s1699 = sand.u32 %s115, 1
        %s1700 = smul.addr %s1699, 16
        %s1701 = scalar_lea.vmem [#allocation2], %s1700
        // Predicated region
        $region37: #{tpu_custom_call.1} parent=35 // pred_check
          %p1702 = pneg %p125
        $region38: #{tpu_custom_call.1} parent=35 // pred_check_branch
          %1704 = sbr.rel (%p1702) target = $region40
        $region39: #{tpu_custom_call.1} parent=35 // pred_region
          %s1706 = ssub.s32 256, 256
          %1707 = vsyncadd %s1698, %s1706
          %s1708 = smul.addr %s18, 2
          %s1709 = smul.addr %s1708, 128
          %s1710 = scalar_lea.hbm %s4, %s1709
          %s1712 = sshll.u32 %s1701, 4
          %s1713 = int_to_ptr.vmem [resolvable:$true] %s1712
          %1715 = dma.vmem_to_hbm [thread:$0]  %s1713, 256, %s1710, %s1698
        $region40: #{tpu_custom_call.1} parent=35 // pred_fallthru
          _
      $region36: #{tpu_custom_call.1} parent=5 // pred_fallthru
        _
      %p1716 = scmp.le.s32.totalorder 2, %s13
      // Predicated region
      $region41: #{tpu_custom_call.1} parent=5 // pred_check
        %p1717 = pneg %p1716
      $region42: #{tpu_custom_call.1} parent=5 // pred_check_branch
        %1719 = sbr.rel (%p1717) target = $region44
      $region43: #{tpu_custom_call.1} parent=5 // pred_region
        %s1720 = ssub.s32 %s13, 2
        // Predicated region
        $region45: #{tpu_custom_call.1} parent=43 // pred_check
          %p1721 = pneg %p131
        $region46: #{tpu_custom_call.1} parent=43 // pred_check_branch
          %1723 = sbr.rel (%p1721) target = $region48
        $region47: #{tpu_custom_call.1} parent=43 // pred_region
          %s1724 = sand.u32 %s116, 1
          %s1725 = scalar_lea.sflag [#allocation3], %s1724
          %s1726 = sand.u32 %s116, 1
          %s1727 = smul.addr %s1726, 16
          %s1728 = scalar_lea.vmem [#allocation2], %s1727
          %1729 = dma.done %s1725, 256
        $region48: #{tpu_custom_call.1} parent=43 // pred_fallthru
          _
      $region44: #{tpu_custom_call.1} parent=5 // pred_fallthru
        _
    $region6: #{tpu_custom_call.1} parent=1 // loop_footer
      %s17 = sadd.s32 1, %s13
    $region7: #{tpu_custom_call.1} parent=1 // loop_footer_branch
      %12 = sbr.rel target = $region3
    $region8: #{tpu_custom_call.1} parent=1 // loop_exit
      _
    %1730 = vsyncpa [#allocation3], 1
    %s1731 = scalar_lea.sflag [#allocation3], 1
    %1732 = vsyncpa %s1731, 1

</llo_original>
